<compile_context>
chip_gen: v7x
topology: tpu7x:2x2x1
jax: 0.10.0
libtpu: 0.0.40
codegen_flags: <defaults>
</compile_context>

<pallas_src>
import functools

import jax
import jax.numpy as jnp
from jax.experimental import pallas as pl
from jax.experimental.pallas import tpu as pltpu


def convblock_kernel(x_ref, w_ref, scale_ref, shift_ref, o_ref, *,
                     stride, th, wo, cin, fold):
    # x_ref:     (s*s, Hq, Wq, Cin)  bf16  padded, phase-split image (one batch elem)
    # w_ref:     (9*Cin, tc)         bf16  conv-weight tile (tap-major contraction dim)
    # scale_ref: (1, tc)             f32   folded BN scale  (gamma * rsqrt(var+eps))
    # shift_ref: (1, tc)             f32   folded BN shift  (beta - mean*scale)
    # o_ref:     (tm, tc)            bf16  one (row-tile x Cout-tile) of flat output
    t = pl.program_id(2)
    tm = th * wo

    def tap_operand(dy, dx):
        p = (dy % stride) * stride + (dx % stride)          # static phase index
        r0 = t * th + dy // stride                          # dynamic row start
        c0 = dx // stride                                   # static col start
        win = x_ref[p, pl.ds(r0, th), pl.ds(c0, wo), :]     # (th, wo, cin) bf16
        return win.reshape(tm, cin)

    if fold:
        # Small Cin: one big-K matmul (K = 9*Cin); no per-tap accumulator RMW.
        a = jnp.concatenate(
            [tap_operand(dy, dx) for dy in range(3) for dx in range(3)],
            axis=-1)                                        # (tm, 9*cin)
        acc = jnp.dot(a, w_ref[...], preferred_element_type=jnp.float32)
    else:
        # Large Cin: 9 chained dots, no interleaved VPU work between them.
        acc = None
        for dy in range(3):
            for dx in range(3):
                k0 = (dy * 3 + dx) * cin
                part = jnp.dot(tap_operand(dy, dx),
                               w_ref[pl.ds(k0, cin), :],
                               preferred_element_type=jnp.float32)
                acc = part if acc is None else acc + part

    # f32 epilogue: BN scale + shift, then ReLU6 clamp; bf16 store.
    y = jnp.clip(acc * scale_ref[...] + shift_ref[...], 0.0, 6.0)
    o_ref[...] = y.astype(o_ref.dtype)


@functools.partial(jax.jit, static_argnames=("stride", "eps", "out_dtype"))
def conv_block_forward(x_nchw, weight_oihw, gamma, beta, running_mean,
                       running_var, *, stride=1, eps=1e-5,
                       out_dtype=jnp.bfloat16):
    """Inference forward pass of ConvBlock. Takes/returns NCHW (PyTorch layout)."""
    c_out, c_in, kh, kw = weight_oihw.shape
    assert (kh, kw) == (3, 3)
    n, _, h, w = x_nchw.shape
    ho = (h + 2 - 3) // stride + 1
    wo = (w + 2 - 3) // stride + 1
    cout_p = ((c_out + 127) // 128) * 128                   # lane-dense output channels
    tc = 256 if cout_p % 256 == 0 else 128                  # Cout tile per grid step
    co_tiles = cout_p // tc

    # ---- Fold BatchNorm (inference) into per-channel scale/shift (kept f32) ----
    inv_std = jax.lax.rsqrt(running_var.astype(jnp.float32) + eps)
    scale = gamma.astype(jnp.float32) * inv_std
    shift = beta.astype(jnp.float32) - running_mean.astype(jnp.float32) * scale
    scale_p = jnp.pad(scale, (0, cout_p - c_out)).reshape(1, cout_p)
    shift_p = jnp.pad(shift, (0, cout_p - c_out)).reshape(1, cout_p)

    # ---- Weight: (Cout,Cin,3,3) -> (9*Cin, Cout_p) bf16, tap-major K ordering ----
    w_mat = jnp.transpose(weight_oihw, (2, 3, 1, 0)).reshape(9 * c_in, c_out)
    w_mat = jnp.pad(w_mat, ((0, 0), (0, cout_p - c_out))).astype(jnp.bfloat16)

    # ---- Input: NCHW -> NHWC bf16, zero-pad, space-to-depth phase split ----
    x_nhwc = jnp.transpose(x_nchw, (0, 2, 3, 1)).astype(jnp.bfloat16)
    xp = jnp.pad(x_nhwc, ((0, 0), (1, 1), (1, 1), (0, 0)))
    hp, wp = h + 2, w + 2
    hq, wq = -(-hp // stride), -(-wp // stride)
    s2 = stride * stride
    if stride == 1:
        x_s2d = xp[:, None]                                 # free reshape, no extra HBM pass
    else:
        phases = []
        for py in range(stride):
            for px in range(stride):
                ph = xp[:, py::stride, px::stride, :]
                ph = jnp.pad(ph, ((0, 0), (0, hq - ph.shape[1]),
                                  (0, wq - ph.shape[2]), (0, 0)))
                phases.append(ph)
        x_s2d = jnp.stack(phases, axis=1)                   # (N, s*s, Hq, Wq, Cin)

    # ---- Row tiling: largest th | Ho with tm = th*Wo <= 1024 and tm % 8 == 0
    # (sublane-aligned, unmasked stores); th == Ho (full block) is always legal.
    # TODO(synk): ragged (cdiv) row tiling with a masked tail tile for Ho with
    # no convenient divisor; currently we just pick a smaller divisor instead.
    cands = [d for d in range(1, ho + 1) if ho % d == 0 and d * wo <= 1024]
    aligned = [d for d in cands if (d * wo) % 8 == 0 or d == ho]
    th = max(aligned) if aligned else (max(cands) if cands else ho)
    tm = th * wo
    t_tiles = ho // th

    fold = c_in <= 128
    kernel = functools.partial(convblock_kernel, stride=stride, th=th, wo=wo,
                               cin=c_in, fold=fold)

    # ---- VMEM budget: double-buffered blocks + in-kernel temporaries ----
    x_blk = s2 * hq * wq * c_in * 2
    w_blk = 9 * c_in * tc * 2
    o_blk = tm * tc * jnp.dtype(out_dtype).itemsize
    s_blk = 2 * tc * 4
    tmp = tm * tc * 4 + tm * (9 * c_in if fold else c_in) * 2
    vmem_need = 2 * (x_blk + w_blk + o_blk + s_blk) + tmp
    vmem_limit = int(min(96 * 2 ** 20, max(32 * 2 ** 20, 2 * vmem_need)))
    # TODO(synk): layers whose whole padded image per batch element exceeds the
    # VMEM budget (huge H*W*Cin on v7x's 64 MiB) need spatial halo tiling of the
    # input (manual DMA / emit_pipeline) instead of whole-image residency.

    flops = 2 * n * ho * wo * 9 * c_in * cout_p
    bytes_accessed = (x_s2d.size * 2 + w_mat.size * 2 + 2 * cout_p * 4
                      + n * ho * wo * cout_p * jnp.dtype(out_dtype).itemsize)

    out = pl.pallas_call(
        kernel,
        out_shape=jax.ShapeDtypeStruct((n, ho * wo, cout_p), out_dtype),
        grid_spec=pltpu.PrefetchScalarGridSpec(
            num_scalar_prefetch=0,
            grid=(n, co_tiles, t_tiles),
            in_specs=[
                # Whole phase-split image for batch element b stays VMEM-resident
                # across the Cout-tile and row-tile axes (same block index).
                pl.BlockSpec((None, s2, hq, wq, c_in),
                             lambda b, co, t: (b, 0, 0, 0, 0)),
                pl.BlockSpec((9 * c_in, tc), lambda b, co, t: (0, co)),
                pl.BlockSpec((1, tc), lambda b, co, t: (0, co)),
                pl.BlockSpec((1, tc), lambda b, co, t: (0, co)),
            ],
            out_specs=pl.BlockSpec((None, tm, tc), lambda b, co, t: (b, t, co)),
        ),
        compiler_params=pltpu.CompilerParams(
            dimension_semantics=("parallel", "parallel", "parallel"),
            vmem_limit_bytes=vmem_limit,
        ),
        cost_estimate=pl.CostEstimate(flops=flops, transcendentals=0,
                                      bytes_accessed=bytes_accessed),
    )(x_s2d, w_mat, scale_p, shift_p)

    out = out.reshape(n, ho, wo, cout_p)[..., :c_out]       # drop Cout padding
    return jnp.transpose(out, (0, 3, 1, 2))                 # NHWC -> NCHW
    # TODO(synk): training-mode BatchNorm (batch statistics) is not implemented;
    # this is the inference (running-stats) forward pass like the eval-mode module.


if __name__ == "__main__":
    key = jax.random.PRNGKey(0)
    k_x, k_w, k_g, k_b, k_m, k_v = jax.random.split(key, 6)

    N, C_IN, H, W = 2, 4, 16, 16
    C_OUT = 8

    x = jax.random.normal(k_x, (N, C_IN, H, W), dtype=jnp.float32)
    weight = jax.random.normal(k_w, (C_OUT, C_IN, 3, 3), dtype=jnp.float32) * 0.1
    gamma = jax.random.uniform(k_g, (C_OUT,), minval=0.5, maxval=1.5)
    beta = jax.random.normal(k_b, (C_OUT,)) * 0.1
    running_mean = jax.random.normal(k_m, (C_OUT,)) * 0.1
    running_var = jax.random.uniform(k_v, (C_OUT,), minval=0.5, maxval=1.5)

    def reference(x_in, stride):
        x_nhwc = jnp.transpose(x_in, (0, 2, 3, 1))
        w_hwio = jnp.transpose(weight, (2, 3, 1, 0))
        ref = jax.lax.conv_general_dilated(
            x_nhwc, w_hwio, window_strides=(stride, stride),
            padding=((1, 1), (1, 1)),
            dimension_numbers=("NHWC", "HWIO", "NHWC"))
        inv_std = jax.lax.rsqrt(running_var + 1e-5)
        ref = jnp.clip(ref * (gamma * inv_std)
                       + (beta - running_mean * gamma * inv_std), 0.0, 6.0)
        return jnp.transpose(ref, (0, 3, 1, 2))

    # stride = 1
    out1 = conv_block_forward(x, weight, gamma, beta, running_mean,
                              running_var, stride=1)
    out1 = jax.block_until_ready(out1)
    ref1 = reference(x, 1)
    assert out1.shape == (N, C_OUT, H, W)
    assert jnp.max(jnp.abs(out1 - ref1)) < 5e-2   # bf16 MXU inputs/output -> looser tol

    # stride = 2 (MobileNet downsampling blocks)
    out2 = conv_block_forward(x, weight, gamma, beta, running_mean,
                              running_var, stride=2)
    out2 = jax.block_until_ready(out2)
    ref2 = reference(x, 2)
    assert out2.shape == (N, C_OUT, H // 2, W // 2)
    assert jnp.max(jnp.abs(out2 - ref2)) < 5e-2

    print("KERNEL_OK")
</pallas_src>

<mosaic_0001>
module attributes {stable_mosaic.version = 11 : i64} {
  func.func @convblock_kernel(%arg0: i32, %arg1: i32, %arg2: i32, %arg3: memref<1x1x18x18x4xbf16, #tpu.memory_space<vmem>>, %arg4: memref<36x128xbf16, #tpu.memory_space<vmem>>, %arg5: memref<1x128xf32, #tpu.memory_space<vmem>>, %arg6: memref<1x128xf32, #tpu.memory_space<vmem>>, %arg7: memref<1x256x128xbf16, #tpu.memory_space<vmem>>) attributes {dimension_semantics = [#tpu.dimension_semantics<parallel>, #tpu.dimension_semantics<parallel>, #tpu.dimension_semantics<parallel>], iteration_bounds = array<i64: 2, 1, 1>, scalar_prefetch = 0 : i64, scratch_operands = 0 : i64, tpu.core_type = #tpu.core_type<tc>, window_params = [{transform_indices = @transform_0, window_bounds = array<i64: 1, 1, 18, 18, 4>}, {transform_indices = @transform_1, window_bounds = array<i64: 36, 128>}, {transform_indices = @transform_2, window_bounds = array<i64: 1, 128>}, {transform_indices = @transform_3, window_bounds = array<i64: 1, 128>}, {transform_indices = @transform_4, window_bounds = array<i64: 1, 256, 128>}]} {
    %c16_i32 = arith.constant 16 : i32
    %0 = arith.muli %arg2, %c16_i32 : i32
    %c0_i32 = arith.constant 0 : i32
    %1 = arith.addi %0, %c0_i32 : i32
    %c0 = arith.constant 0 : index
    %c0_0 = arith.constant 0 : index
    %2 = arith.index_cast %1 : i32 to index
    %c0_1 = arith.constant 0 : index
    %c0_2 = arith.constant 0 : index
    %3 = vector.load %arg3[%c0, %c0_0, %2, %c0_1, %c0_2] : memref<1x1x18x18x4xbf16, #tpu.memory_space<vmem>>, vector<1x1x16x16x4xbf16>
    %4 = vector.shape_cast %3 : vector<1x1x16x16x4xbf16> to vector<16x16x4xbf16>
    %5 = vector.shape_cast %4 : vector<16x16x4xbf16> to vector<256x4xbf16>
    %c16_i32_3 = arith.constant 16 : i32
    %6 = arith.muli %arg2, %c16_i32_3 : i32
    %c0_i32_4 = arith.constant 0 : i32
    %7 = arith.addi %6, %c0_i32_4 : i32
    %c0_5 = arith.constant 0 : index
    %c0_6 = arith.constant 0 : index
    %8 = arith.index_cast %7 : i32 to index
    %c1 = arith.constant 1 : index
    %c0_7 = arith.constant 0 : index
    %9 = vector.load %arg3[%c0_5, %c0_6, %8, %c1, %c0_7] : memref<1x1x18x18x4xbf16, #tpu.memory_space<vmem>>, vector<1x1x16x16x4xbf16>
    %10 = vector.shape_cast %9 : vector<1x1x16x16x4xbf16> to vector<16x16x4xbf16>
    %11 = vector.shape_cast %10 : vector<16x16x4xbf16> to vector<256x4xbf16>
    %c16_i32_8 = arith.constant 16 : i32
    %12 = arith.muli %arg2, %c16_i32_8 : i32
    %c0_i32_9 = arith.constant 0 : i32
    %13 = arith.addi %12, %c0_i32_9 : i32
    %c0_10 = arith.constant 0 : index
    %c0_11 = arith.constant 0 : index
    %14 = arith.index_cast %13 : i32 to index
    %c2 = arith.constant 2 : index
    %c0_12 = arith.constant 0 : index
    %15 = vector.load %arg3[%c0_10, %c0_11, %14, %c2, %c0_12] : memref<1x1x18x18x4xbf16, #tpu.memory_space<vmem>>, vector<1x1x16x16x4xbf16>
    %16 = vector.shape_cast %15 : vector<1x1x16x16x4xbf16> to vector<16x16x4xbf16>
    %17 = vector.shape_cast %16 : vector<16x16x4xbf16> to vector<256x4xbf16>
    %c16_i32_13 = arith.constant 16 : i32
    %18 = arith.muli %arg2, %c16_i32_13 : i32
    %c1_i32 = arith.constant 1 : i32
    %19 = arith.addi %18, %c1_i32 : i32
    %c0_14 = arith.constant 0 : index
    %c0_15 = arith.constant 0 : index
    %20 = arith.index_cast %19 : i32 to index
    %c0_16 = arith.constant 0 : index
    %c0_17 = arith.constant 0 : index
    %21 = vector.load %arg3[%c0_14, %c0_15, %20, %c0_16, %c0_17] : memref<1x1x18x18x4xbf16, #tpu.memory_space<vmem>>, vector<1x1x16x16x4xbf16>
    %22 = vector.shape_cast %21 : vector<1x1x16x16x4xbf16> to vector<16x16x4xbf16>
    %23 = vector.shape_cast %22 : vector<16x16x4xbf16> to vector<256x4xbf16>
    %c16_i32_18 = arith.constant 16 : i32
    %24 = arith.muli %arg2, %c16_i32_18 : i32
    %c1_i32_19 = arith.constant 1 : i32
    %25 = arith.addi %24, %c1_i32_19 : i32
    %c0_20 = arith.constant 0 : index
    %c0_21 = arith.constant 0 : index
    %26 = arith.index_cast %25 : i32 to index
    %c1_22 = arith.constant 1 : index
    %c0_23 = arith.constant 0 : index
    %27 = vector.load %arg3[%c0_20, %c0_21, %26, %c1_22, %c0_23] : memref<1x1x18x18x4xbf16, #tpu.memory_space<vmem>>, vector<1x1x16x16x4xbf16>
    %28 = vector.shape_cast %27 : vector<1x1x16x16x4xbf16> to vector<16x16x4xbf16>
    %29 = vector.shape_cast %28 : vector<16x16x4xbf16> to vector<256x4xbf16>
    %c16_i32_24 = arith.constant 16 : i32
    %30 = arith.muli %arg2, %c16_i32_24 : i32
    %c1_i32_25 = arith.constant 1 : i32
    %31 = arith.addi %30, %c1_i32_25 : i32
    %c0_26 = arith.constant 0 : index
    %c0_27 = arith.constant 0 : index
    %32 = arith.index_cast %31 : i32 to index
    %c2_28 = arith.constant 2 : index
    %c0_29 = arith.constant 0 : index
    %33 = vector.load %arg3[%c0_26, %c0_27, %32, %c2_28, %c0_29] : memref<1x1x18x18x4xbf16, #tpu.memory_space<vmem>>, vector<1x1x16x16x4xbf16>
    %34 = vector.shape_cast %33 : vector<1x1x16x16x4xbf16> to vector<16x16x4xbf16>
    %35 = vector.shape_cast %34 : vector<16x16x4xbf16> to vector<256x4xbf16>
    %c16_i32_30 = arith.constant 16 : i32
    %36 = arith.muli %arg2, %c16_i32_30 : i32
    %c2_i32 = arith.constant 2 : i32
    %37 = arith.addi %36, %c2_i32 : i32
    %c0_31 = arith.constant 0 : index
    %c0_32 = arith.constant 0 : index
    %38 = arith.index_cast %37 : i32 to index
    %c0_33 = arith.constant 0 : index
    %c0_34 = arith.constant 0 : index
    %39 = vector.load %arg3[%c0_31, %c0_32, %38, %c0_33, %c0_34] : memref<1x1x18x18x4xbf16, #tpu.memory_space<vmem>>, vector<1x1x16x16x4xbf16>
    %40 = vector.shape_cast %39 : vector<1x1x16x16x4xbf16> to vector<16x16x4xbf16>
    %41 = vector.shape_cast %40 : vector<16x16x4xbf16> to vector<256x4xbf16>
    %c16_i32_35 = arith.constant 16 : i32
    %42 = arith.muli %arg2, %c16_i32_35 : i32
    %c2_i32_36 = arith.constant 2 : i32
    %43 = arith.addi %42, %c2_i32_36 : i32
    %c0_37 = arith.constant 0 : index
    %c0_38 = arith.constant 0 : index
    %44 = arith.index_cast %43 : i32 to index
    %c1_39 = arith.constant 1 : index
    %c0_40 = arith.constant 0 : index
    %45 = vector.load %arg3[%c0_37, %c0_38, %44, %c1_39, %c0_40] : memref<1x1x18x18x4xbf16, #tpu.memory_space<vmem>>, vector<1x1x16x16x4xbf16>
    %46 = vector.shape_cast %45 : vector<1x1x16x16x4xbf16> to vector<16x16x4xbf16>
    %47 = vector.shape_cast %46 : vector<16x16x4xbf16> to vector<256x4xbf16>
    %c16_i32_41 = arith.constant 16 : i32
    %48 = arith.muli %arg2, %c16_i32_41 : i32
    %c2_i32_42 = arith.constant 2 : i32
    %49 = arith.addi %48, %c2_i32_42 : i32
    %c0_43 = arith.constant 0 : index
    %c0_44 = arith.constant 0 : index
    %50 = arith.index_cast %49 : i32 to index
    %c2_45 = arith.constant 2 : index
    %c0_46 = arith.constant 0 : index
    %51 = vector.load %arg3[%c0_43, %c0_44, %50, %c2_45, %c0_46] : memref<1x1x18x18x4xbf16, #tpu.memory_space<vmem>>, vector<1x1x16x16x4xbf16>
    %52 = vector.shape_cast %51 : vector<1x1x16x16x4xbf16> to vector<16x16x4xbf16>
    %53 = vector.shape_cast %52 : vector<16x16x4xbf16> to vector<256x4xbf16>
    %54 = tpu.concatenate %5, %11, %17, %23, %29, %35, %41, %47, %53 in 1 : vector<256x4xbf16>, vector<256x4xbf16>, vector<256x4xbf16>, vector<256x4xbf16>, vector<256x4xbf16>, vector<256x4xbf16>, vector<256x4xbf16>, vector<256x4xbf16>, vector<256x4xbf16> -> vector<256x36xbf16>
    %c0_47 = arith.constant 0 : index
    %c0_48 = arith.constant 0 : index
    %55 = vector.load %arg4[%c0_47, %c0_48] : memref<36x128xbf16, #tpu.memory_space<vmem>>, vector<36x128xbf16>
    %cst = arith.constant dense<0.000000e+00> : vector<256x128xf32>
    %56 = tpu.matmul %54, %55, %cst {dimension_numbers = #tpu.dot_dimension_numbers<[1], [0], [0], [1], [0, 0, 1, 1], [], []>} : vector<256x36xbf16>, vector<36x128xbf16>, vector<256x128xf32> -> vector<256x128xf32>
    %c0_49 = arith.constant 0 : index
    %c0_50 = arith.constant 0 : index
    %57 = vector.load %arg5[%c0_49, %c0_50] : memref<1x128xf32, #tpu.memory_space<vmem>>, vector<1x128xf32>
    %58 = vector.broadcast %57 : vector<1x128xf32> to vector<256x128xf32>
    %59 = arith.mulf %56, %58 : vector<256x128xf32>
    %c0_51 = arith.constant 0 : index
    %c0_52 = arith.constant 0 : index
    %60 = vector.load %arg6[%c0_51, %c0_52] : memref<1x128xf32, #tpu.memory_space<vmem>>, vector<1x128xf32>
    %61 = vector.broadcast %60 : vector<1x128xf32> to vector<256x128xf32>
    %62 = arith.addf %59, %61 : vector<256x128xf32>
    %cst_53 = arith.constant 0.000000e+00 : f32
    %cst_54 = arith.constant 6.000000e+00 : f32
    %63 = vector.broadcast %cst_53 : f32 to vector<256x128xf32>
    %64 = arith.maximumf %63, %62 : vector<256x128xf32>
    %65 = vector.broadcast %cst_54 : f32 to vector<256x128xf32>
    %66 = arith.minimumf %65, %64 : vector<256x128xf32>
    %67 = arith.truncf %66 : vector<256x128xf32> to vector<256x128xbf16>
    %c0_55 = arith.constant 0 : index
    %c0_56 = arith.constant 0 : index
    %c0_57 = arith.constant 0 : index
    %68 = vector.load %arg7[%c0_55, %c0_56, %c0_57] : memref<1x256x128xbf16, #tpu.memory_space<vmem>>, vector<1x256x128xbf16>
    %69 = vector.shape_cast %68 : vector<1x256x128xbf16> to vector<256x128xbf16>
    %70 = vector.shape_cast %67 : vector<256x128xbf16> to vector<1x256x128xbf16>
    tpu.vector_store %arg7[%c0_55, %c0_56, %c0_57], %70 {strides = array<i32>} : memref<1x256x128xbf16, #tpu.memory_space<vmem>>, vector<1x256x128xbf16>,
    return
  }
  func.func @transform_0(%arg0: i32, %arg1: i32, %arg2: i32) -> (i32, i32, i32, i32, i32) {
    %c0_i32 = arith.constant 0 : i32
    %c0_i32_0 = arith.constant 0 : i32
    %c0_i32_1 = arith.constant 0 : i32
    %c0_i32_2 = arith.constant 0 : i32
    %c0_i32_3 = arith.constant 0 : i32
    return %arg0, %c0_i32, %c0_i32_0, %c0_i32_1, %c0_i32_2 : i32, i32, i32, i32, i32
  }
  func.func @transform_1(%arg0: i32, %arg1: i32, %arg2: i32) -> (i32, i32) {
    %c0_i32 = arith.constant 0 : i32
    %c0_i32_0 = arith.constant 0 : i32
    return %c0_i32, %arg1 : i32, i32
  }
  func.func @transform_2(%arg0: i32, %arg1: i32, %arg2: i32) -> (i32, i32) {
    %c0_i32 = arith.constant 0 : i32
    %c0_i32_0 = arith.constant 0 : i32
    return %c0_i32, %arg1 : i32, i32
  }
  func.func @transform_3(%arg0: i32, %arg1: i32, %arg2: i32) -> (i32, i32) {
    %c0_i32 = arith.constant 0 : i32
    %c0_i32_0 = arith.constant 0 : i32
    return %c0_i32, %arg1 : i32, i32
  }
  func.func @transform_4(%arg0: i32, %arg1: i32, %arg2: i32) -> (i32, i32, i32) {
    %c0_i32 = arith.constant 0 : i32
    return %arg0, %arg2, %arg1 : i32, i32, i32
  }
}

</mosaic_0001>

<llo_original>
// kernel: conv_block_forward.1
$region0: #{conv_block_forward.1}
  #allocation0 [shape = 'u32[]', space=smem, size = 0x4, offset = 0x4, fixed_abs, tag = 'smem constant byte address 0x4 - core index']
  #allocation1 [shape = 'u32[144,128]{1,0:T(1,128)}', space=vmem, size = 0x12000, scoped, tag = 'internal scratch']
  %s0 = inlined_call_operand.vmem [shape: bf16[2,1,18,18,4], index: 0, kind: input, shape index: {}]
  %s1 = inlined_call_operand.vmem [shape: bf16[36,128], index: 1, kind: input, shape index: {}]
  %s2 = inlined_call_operand.vmem [shape: f32[1,128], index: 2, kind: input, shape index: {}]
  %s3 = inlined_call_operand.vmem [shape: f32[1,128], index: 3, kind: input, shape index: {}]
  %s4 = inlined_call_operand.vmem [shape: bf16[2,256,128], index: 4, kind: output, shape index: {}]
  %s5 = sld [smem:[#allocation0]]
  $region49: #{conv_block_forward.1} parent=0
    _
  %s7 = ssub.s32 1, %s5
  %s8 = scalar_select 0, %s7, %s5
  loop: start=0, step=1, limit=4
  $region2: #{conv_block_forward.1} parent=0 // loop_pre_header
    _
  $region3: #{conv_block_forward.1} parent=0 // loop_header
    %s10 = sphi 0, %s14
    %p11 = scmp.ge.s32.totalorder %s10, 4
    %s17 = sphi 0, %s36
    %s18 = sphi 0, %s32
    %s19 = sphi 0, %s28
    %s20 = sphi 0, %s17
    %s21 = sphi 0, %s18
    %s22 = sphi 0, %s19
    %s23 = sphi 0, %s20
    %s24 = sphi 0, %s21
    %s25 = sphi 0, %s22
    %s39 = sphi 0, %s41
    %s42 = sphi 0, %s39
    %s43 = sphi 0, %s42
    %s59 = sphi 0, %s43
    %s65 = sphi 0, %s67
    %s68 = sphi 0, %s65
    %s69 = sphi 0, %s68
    %s85 = sphi 0, %s69
    %s91 = sphi 0, %s93
    %s94 = sphi 0, %s91
    %s95 = sphi 0, %s94
    %s111 = sphi 0, %s95
    %s117 = sphi 0, %s119
    %s120 = sphi 0, %s117
    %s121 = sphi 0, %s120
    %s137 = sphi 0, %s121
    %s147 = sphi 0, %s149
    %s150 = sphi 0, %s147
    %s151 = sphi 0, %s150
    %s167 = sphi 0, %s151
  $region4: #{conv_block_forward.1} parent=0 // loop_header_branch
    %13 = sbr.rel (%p11) target = $region8
  $region5: #{conv_block_forward.1} parent=0 // loop_body
    %s15 = ssub.s32 %s10, 1
    %s16 = ssub.s32 %s10, 2
    %s26 = sadd.s32 1, %s19
    %p27 = scmp.ge.s32.totalorder %s26, 1
    %s28 = scalar_select %p27, 0, %s26
    %s29 = sadd.s32 1, %s18
    %s30 = scalar_select %p27, %s29, %s18
    %p31 = scmp.ge.s32.totalorder %s30, 1
    %s32 = scalar_select %p31, 0, %s30
    %s33 = sadd.s32 1, %s17
    %s34 = scalar_select %p31, %s33, %s17
    %p35 = scmp.ge.s32.totalorder %s34, 2
    %s36 = scalar_select %p35, 0, %s34
    %s37 = ssub.s32 %s17, %s36
    %p38 = scmp.eq.s32.totalorder %s37, 0
    %s40 = sadd.s32 %s39, 1
    %s41 = scalar_select %p38, %s39, %s40
    %p44 = pneg %p38
    %p45 = scmp.eq.s32.totalorder %s10, 1
    %p46 = por %p44, %p45
    %p47 = scmp.ne.s32.totalorder %s39, %s42
    %p48 = scmp.eq.s32.totalorder %s10, 0
    %p49 = por %p47, %p48
    %p50 = scmp.ne.s32.totalorder %s39, %s42
    %p51 = scmp.eq.s32.totalorder %s15, 1
    %p52 = por %p50, %p51
    %p53 = scmp.ne.s32.totalorder %s42, %s43
    %p54 = scmp.eq.s32.totalorder %s15, 0
    %p55 = por %p53, %p54
    %p56 = scmp.ne.s32.totalorder %s42, %s43
    %p57 = scmp.eq.s32.totalorder %s16, 1
    %p58 = por %p56, %p57
    %p60 = scmp.ne.s32.totalorder %s43, %s59
    %p61 = scmp.eq.s32.totalorder %s16, 0
    %p62 = por %p60, %p61
    %s63 = ssub.s32 %s18, %s32
    %p64 = scmp.eq.s32.totalorder %s63, 0
    %s66 = sadd.s32 %s65, 1
    %s67 = scalar_select %p64, %s65, %s66
    %p70 = pneg %p64
    %p71 = scmp.eq.s32.totalorder %s10, 1
    %p72 = por %p70, %p71
    %p73 = scmp.ne.s32.totalorder %s65, %s68
    %p74 = scmp.eq.s32.totalorder %s10, 0
    %p75 = por %p73, %p74
    %p76 = scmp.ne.s32.totalorder %s65, %s68
    %p77 = scmp.eq.s32.totalorder %s15, 1
    %p78 = por %p76, %p77
    %p79 = scmp.ne.s32.totalorder %s68, %s69
    %p80 = scmp.eq.s32.totalorder %s15, 0
    %p81 = por %p79, %p80
    %p82 = scmp.ne.s32.totalorder %s68, %s69
    %p83 = scmp.eq.s32.totalorder %s16, 1
    %p84 = por %p82, %p83
    %p86 = scmp.ne.s32.totalorder %s69, %s85
    %p87 = scmp.eq.s32.totalorder %s16, 0
    %p88 = por %p86, %p87
    %s89 = ssub.s32 %s18, %s32
    %p90 = scmp.eq.s32.totalorder %s89, 0
    %s92 = sadd.s32 %s91, 1
    %s93 = scalar_select %p90, %s91, %s92
    %p96 = pneg %p90
    %p97 = scmp.eq.s32.totalorder %s10, 1
    %p98 = por %p96, %p97
    %p99 = scmp.ne.s32.totalorder %s91, %s94
    %p100 = scmp.eq.s32.totalorder %s10, 0
    %p101 = por %p99, %p100
    %p102 = scmp.ne.s32.totalorder %s91, %s94
    %p103 = scmp.eq.s32.totalorder %s15, 1
    %p104 = por %p102, %p103
    %p105 = scmp.ne.s32.totalorder %s94, %s95
    %p106 = scmp.eq.s32.totalorder %s15, 0
    %p107 = por %p105, %p106
    %p108 = scmp.ne.s32.totalorder %s94, %s95
    %p109 = scmp.eq.s32.totalorder %s16, 1
    %p110 = por %p108, %p109
    %p112 = scmp.ne.s32.totalorder %s95, %s111
    %p113 = scmp.eq.s32.totalorder %s16, 0
    %p114 = por %p112, %p113
    %s115 = ssub.s32 %s18, %s32
    %p116 = scmp.eq.s32.totalorder %s115, 0
    %s118 = sadd.s32 %s117, 1
    %s119 = scalar_select %p116, %s117, %s118
    %p122 = pneg %p116
    %p123 = scmp.eq.s32.totalorder %s10, 1
    %p124 = por %p122, %p123
    %p125 = scmp.ne.s32.totalorder %s117, %s120
    %p126 = scmp.eq.s32.totalorder %s10, 0
    %p127 = por %p125, %p126
    %p128 = scmp.ne.s32.totalorder %s117, %s120
    %p129 = scmp.eq.s32.totalorder %s15, 1
    %p130 = por %p128, %p129
    %p131 = scmp.ne.s32.totalorder %s120, %s121
    %p132 = scmp.eq.s32.totalorder %s15, 0
    %p133 = por %p131, %p132
    %p134 = scmp.ne.s32.totalorder %s120, %s121
    %p135 = scmp.eq.s32.totalorder %s16, 1
    %p136 = por %p134, %p135
    %p138 = scmp.ne.s32.totalorder %s121, %s137
    %p139 = scmp.eq.s32.totalorder %s16, 0
    %p140 = por %p138, %p139
    %s141 = ssub.s32 %s17, %s36
    %s142 = ssub.s32 %s19, %s28
    %s143 = sor.u32 %s141, %s142
    %s144 = ssub.s32 %s18, %s32
    %s145 = sor.u32 %s143, %s144
    %p146 = scmp.eq.s32.totalorder %s145, 0
    %s148 = sadd.s32 %s147, 1
    %s149 = scalar_select %p146, %s147, %s148
    %p152 = pneg %p146
    %p153 = scmp.eq.s32.totalorder %s10, 1
    %p154 = por %p152, %p153
    %p155 = scmp.ne.s32.totalorder %s147, %s150
    %p156 = scmp.eq.s32.totalorder %s10, 0
    %p157 = por %p155, %p156
    %p158 = scmp.ne.s32.totalorder %s147, %s150
    %p159 = scmp.eq.s32.totalorder %s15, 1
    %p160 = por %p158, %p159
    %p161 = scmp.ne.s32.totalorder %s150, %s151
    %p162 = scmp.eq.s32.totalorder %s15, 0
    %p163 = por %p161, %p162
    %p164 = scmp.ne.s32.totalorder %s150, %s151
    %p165 = scmp.eq.s32.totalorder %s16, 1
    %p166 = por %p164, %p165
    %p168 = scmp.ne.s32.totalorder %s151, %s167
    %p169 = scmp.eq.s32.totalorder %s16, 0
    %p170 = por %p168, %p169
    %p171 = scmp.le.s32.totalorder 1, %s10
    %p172 = scmp.lt.s32.totalorder %s10, 3
    %p173 = pnand %p171, %p172
    %p174 = pneg %p173
    // Predicated region
    $region9: #{conv_block_forward.1} parent=5 // pred_check
      _
    $region10: #{conv_block_forward.1} parent=5 // pred_check_branch
      %176 = sbr.rel (%p173) target = $region12
    $region11: #{conv_block_forward.1} parent=5 // pred_region
      %s177 = ssub.s32 %s10, 1
      // Predicated region
      $region13: #{conv_block_forward.1} parent=11 // pred_check
        %p178 = pneg %p81
      $region14: #{conv_block_forward.1} parent=11 // pred_check_branch
        %180 = sbr.rel (%p178) target = $region16
      $region15: #{conv_block_forward.1} parent=11 // pred_region
        %p181 = scmp.lt.s32.totalorder %s21, 0
        %s182 = scalar_select %p181, %s21, 0
        %s183 = smul.addr %s182, 4
        %s184 = scalar_lea.vmem %s1, %s183
      $region16: #{conv_block_forward.1} parent=11 // pred_fallthru
        _
      // Predicated region
      $region17: #{conv_block_forward.1} parent=11 // pred_check
        %p185 = pneg %p107
      $region18: #{conv_block_forward.1} parent=11 // pred_check_branch
        %187 = sbr.rel (%p185) target = $region20
      $region19: #{conv_block_forward.1} parent=11 // pred_region
        %p188 = scmp.lt.s32.totalorder %s21, 0
        %s189 = scalar_select %p188, %s21, 0
        %s190 = scalar_lea.vmem %s2, %s189
      $region20: #{conv_block_forward.1} parent=11 // pred_fallthru
        _
      // Predicated region
      $region21: #{conv_block_forward.1} parent=11 // pred_check
        %p191 = pneg %p133
      $region22: #{conv_block_forward.1} parent=11 // pred_check_branch
        %193 = sbr.rel (%p191) target = $region24
      $region23: #{conv_block_forward.1} parent=11 // pred_region
        %p194 = scmp.lt.s32.totalorder %s21, 0
        %s195 = scalar_select %p194, %s21, 0
        %s196 = scalar_lea.vmem %s3, %s195
      $region24: #{conv_block_forward.1} parent=11 // pred_fallthru
        _
    $region12: #{conv_block_forward.1} parent=5 // pred_fallthru
      _
    %p197 = scmp.lt.s32.totalorder %s10, 2
    // Predicated region
    $region25: #{conv_block_forward.1} parent=5 // pred_check
      %p198 = pneg %p197
    $region26: #{conv_block_forward.1} parent=5 // pred_check_branch
      %200 = sbr.rel (%p198) target = $region28
    $region27: #{conv_block_forward.1} parent=5 // pred_region
      // Predicated region
      $region29: #{conv_block_forward.1} parent=27 // pred_check
        %p201 = pneg %p49
      $region30: #{conv_block_forward.1} parent=27 // pred_check_branch
        %203 = sbr.rel (%p201) target = $region32
      $region31: #{conv_block_forward.1} parent=27 // pred_region
        %p204 = scmp.lt.s32.totalorder %s17, 1
        %s205 = scalar_select %p204, %s17, 1
        %s206 = smul.addr %s205, 54
        %s207 = smul.addr %s206, 4
        %s208 = scalar_lea.vmem %s0, %s207
      $region32: #{conv_block_forward.1} parent=27 // pred_fallthru
        _
    $region28: #{conv_block_forward.1} parent=5 // pred_fallthru
      _
    %p209 = scmp.le.s32.totalorder 1, %s10
    %p210 = scmp.lt.s32.totalorder %s10, 3
    %p211 = pnand %p209, %p210
    %p212 = pneg %p211
    // Predicated region
    $region33: #{conv_block_forward.1} parent=5 // pred_check
      _
    $region34: #{conv_block_forward.1} parent=5 // pred_check_branch
      %214 = sbr.rel (%p211) target = $region36
    $region35: #{conv_block_forward.1} parent=5 // pred_region
      %s215 = ssub.s32 %s10, 1
      %p216 = scmp.lt.s32.totalorder %s20, 1
      %s217 = scalar_select %p216, %s20, 1
      %s218 = smul.addr %s217, 54
      %s219 = smul.addr %s218, 4
      %s220 = scalar_lea.vmem %s0, %s219
      %p221 = pneg %p55
      %p222 = pneg %p52
      %p223 = scmp.lt.s32.totalorder %s21, 0
      %s224 = scalar_select %p223, %s21, 0
      %s225 = smul.addr %s224, 4
      %s226 = scalar_lea.vmem %s1, %s225
      %p227 = pneg %p81
      %p228 = pneg %p78
      %p229 = scmp.lt.s32.totalorder %s21, 0
      %s230 = scalar_select %p229, %s21, 0
      %s231 = scalar_lea.vmem %s2, %s230
      %p232 = pneg %p107
      %p233 = pneg %p104
      %p234 = scmp.lt.s32.totalorder %s21, 0
      %s235 = scalar_select %p234, %s21, 0
      %s236 = scalar_lea.vmem %s3, %s235
      %p237 = pneg %p133
      %p238 = pneg %p130
      %p239 = pneg %p163
      %p240 = pneg %p160
      %s241 = smul.u32 32, %s22
      %p242 = scmp.lt.s32.totalorder %s20, 1
      %s243 = scalar_select %p242, %s20, 1
      %p244 = scmp.lt.s32.totalorder %s241, 31
      %s245 = scalar_select %p244, %s241, 31
      %p246 = scmp.lt.s32.totalorder %s21, 0
      %s247 = scalar_select %p246, %s21, 0
      %s248 = sadd.s32 %s247, %s245
      %s249 = smul.addr %s243, 32
      %s250 = sadd.s32 %s248, %s249
      %s251 = smul.addr %s250, 4
      %s252 = scalar_lea.vmem %s4, %s251
      %p253 = scmp.lt.s32.totalorder %s20, 1
      %s254 = scalar_select %p253, %s20, 1
      %s255 = smul.addr %s254, 54
      %s256 = smul.addr %s255, 4
      %s257 = scalar_lea.vmem %s0, %s256
      %p258 = scmp.lt.s32.totalorder %s21, 0
      %s259 = scalar_select %p258, %s21, 0
      %s260 = smul.addr %s259, 4
      %s261 = scalar_lea.vmem %s1, %s260
      %p262 = scmp.lt.s32.totalorder %s21, 0
      %s263 = scalar_select %p262, %s21, 0
      %s264 = scalar_lea.vmem %s2, %s263
      %p265 = scmp.lt.s32.totalorder %s21, 0
      %s266 = scalar_select %p265, %s21, 0
      %s267 = scalar_lea.vmem %s3, %s266
      %s268 = smul.u32 32, %s22
      %p269 = scmp.lt.s32.totalorder %s20, 1
      %s270 = scalar_select %p269, %s20, 1
      %p271 = scmp.lt.s32.totalorder %s268, 31
      %s272 = scalar_select %p271, %s268, 31
      %p273 = scmp.lt.s32.totalorder %s21, 0
      %s274 = scalar_select %p273, %s21, 0
      %s275 = sadd.s32 %s274, %s272
      %s276 = smul.addr %s270, 32
      %s277 = sadd.s32 %s275, %s276
      %s278 = smul.addr %s277, 4
      %s279 = scalar_lea.vmem %s4, %s278
      %s280 = smul.u32 32, %s22
      %s282 = smul.u32 %s22, 16
      %s283 = smul.u32 %s282, 3
      %s284 = smul.addr %s283, 4
      %s285 = scalar_lea.vmem %s257, %s284
      %v286 = vld [vmem:[%s285] sm:$0xf]
      %v287 = vld [vmem:[%s285 + $0x4] sm:$0xf]
      %v288 = vld [vmem:[%s285 + $0xc] sm:$0xf]
      %v289 = vld [vmem:[%s285 + $0x10] sm:$0xf]
      %v290 = vld [vmem:[%s285 + $0x18] sm:$0xf]
      %v291 = vld [vmem:[%s285 + $0x1c] sm:$0xf]
      %v292 = vld [vmem:[%s285 + $0x24] sm:$0xf]
      %v293 = vld [vmem:[%s285 + $0x28] sm:$0xf]
      %v294 = vld [vmem:[%s285 + $0x30] sm:$0xf]
      %v295 = vld [vmem:[%s285 + $0x34] sm:$0xf]
      %v296 = vld [vmem:[%s285 + $0x3c] sm:$0xf]
      %v297 = vld [vmem:[%s285 + $0x40] sm:$0xf]
      %v298 = vld [vmem:[%s285 + $0x48] sm:$0xf]
      %v299 = vld [vmem:[%s285 + $0x4c] sm:$0xf]
      %v300 = vld [vmem:[%s285 + $0x54] sm:$0xf]
      %v301 = vld [vmem:[%s285 + $0x58] sm:$0xf]
      %v302 = vld [vmem:[%s285 + $0x60] sm:$0xf]
      %v303 = vld [vmem:[%s285 + $0x64] sm:$0xf]
      %v304 = vld [vmem:[%s285 + $0x6c] sm:$0xf]
      %v305 = vld [vmem:[%s285 + $0x70] sm:$0xf]
      %v306 = vld [vmem:[%s285 + $0x78] sm:$0xf]
      %v307 = vld [vmem:[%s285 + $0x7c] sm:$0xf]
      %v308 = vld [vmem:[%s285 + $0x84] sm:$0xf]
      %v309 = vld [vmem:[%s285 + $0x88] sm:$0xf]
      %v310 = vld [vmem:[%s285 + $0x90] sm:$0xf]
      %v311 = vld [vmem:[%s285 + $0x94] sm:$0xf]
      %v312 = vld [vmem:[%s285 + $0x9c] sm:$0xf]
      %v313 = vld [vmem:[%s285 + $0xa0] sm:$0xf]
      %v314 = vld [vmem:[%s285 + $0xa8] sm:$0xf]
      %v315 = vld [vmem:[%s285 + $0xac] sm:$0xf]
      %v316 = vld [vmem:[%s285 + $0xb4] sm:$0xf]
      %v317 = vld [vmem:[%s285 + $0xb8] sm:$0xf]
      %v318 = vld [vmem:[%s285 + $0x8] sm:$0x1]
      %v319 = vld [vmem:[%s285 + $0x14] sm:$0x1]
      %v320 = vld [vmem:[%s285 + $0x20] sm:$0x1]
      %v321 = vld [vmem:[%s285 + $0x2c] sm:$0x1]
      %v322 = vld [vmem:[%s285 + $0x38] sm:$0x1]
      %v323 = vld [vmem:[%s285 + $0x44] sm:$0x1]
      %v324 = vld [vmem:[%s285 + $0x50] sm:$0x1]
      %v325 = vld [vmem:[%s285 + $0x5c] sm:$0x1]
      %v326 = vld [vmem:[%s285 + $0x68] sm:$0x1]
      %v327 = vld [vmem:[%s285 + $0x74] sm:$0x1]
      %v328 = vld [vmem:[%s285 + $0x80] sm:$0x1]
      %v329 = vld [vmem:[%s285 + $0x8c] sm:$0x1]
      %v330 = vld [vmem:[%s285 + $0x98] sm:$0x1]
      %v331 = vld [vmem:[%s285 + $0xa4] sm:$0x1]
      %v332 = vld [vmem:[%s285 + $0xb0] sm:$0x1]
      %v333 = vld [vmem:[%s285 + $0xbc] sm:$0x1]
      %vm334 = vsmask.f32 3328
      %vm335 = vsmask.f32 7440
      %vm336 = vmor %vm334, %vm335
      %v338 = vshrl.u32 %v286, 16
      %v340 = vrot.slane %v338, 4
      %v341 = vshll.u32 %v286, 16
      %v343 = vrot.slane %v341, 5
      %v344 = vor.u32 %v340, %v343
      %v345 = vrot.slane %v344, 4
      %v347 = vshll.u32 %v287, 16
      %v349 = vrot.slane %v347, 5
      %v350 = vsel %vm336, %v345, %v349
      %v351 = vshrl.u32 %v287, 16
      %v353 = vrot.slane %v351, 4
      %v354 = vor.u32 %v353, %v349
      %v355 = vrot.slane %v354, 4
      %v357 = vshll.u32 %v318, 16
      %v359 = vrot.slane %v357, 5
      %v360 = vsel %vm336, %v355, %v359
      %v362 = vshrl.u32 %v288, 16
      %v364 = vrot.slane %v362, 4
      %v365 = vshll.u32 %v288, 16
      %v367 = vrot.slane %v365, 5
      %v368 = vor.u32 %v364, %v367
      %v369 = vrot.slane %v368, 4
      %v371 = vshll.u32 %v289, 16
      %v373 = vrot.slane %v371, 5
      %v374 = vsel %vm336, %v369, %v373
      %v375 = vshrl.u32 %v289, 16
      %v377 = vrot.slane %v375, 4
      %v378 = vor.u32 %v377, %v373
      %v379 = vrot.slane %v378, 4
      %v381 = vshll.u32 %v319, 16
      %v383 = vrot.slane %v381, 5
      %v384 = vsel %vm336, %v379, %v383
      %v386 = vshrl.u32 %v290, 16
      %v388 = vrot.slane %v386, 4
      %v389 = vshll.u32 %v290, 16
      %v391 = vrot.slane %v389, 5
      %v392 = vor.u32 %v388, %v391
      %v393 = vrot.slane %v392, 4
      %v395 = vshll.u32 %v291, 16
      %v397 = vrot.slane %v395, 5
      %v398 = vsel %vm336, %v393, %v397
      %v399 = vshrl.u32 %v291, 16
      %v401 = vrot.slane %v399, 4
      %v402 = vor.u32 %v401, %v397
      %v403 = vrot.slane %v402, 4
      %v405 = vshll.u32 %v320, 16
      %v407 = vrot.slane %v405, 5
      %v408 = vsel %vm336, %v403, %v407
      %v410 = vshrl.u32 %v292, 16
      %v412 = vrot.slane %v410, 4
      %v413 = vshll.u32 %v292, 16
      %v415 = vrot.slane %v413, 5
      %v416 = vor.u32 %v412, %v415
      %v417 = vrot.slane %v416, 4
      %v419 = vshll.u32 %v293, 16
      %v421 = vrot.slane %v419, 5
      %v422 = vsel %vm336, %v417, %v421
      %v423 = vshrl.u32 %v293, 16
      %v425 = vrot.slane %v423, 4
      %v426 = vor.u32 %v425, %v421
      %v427 = vrot.slane %v426, 4
      %v429 = vshll.u32 %v321, 16
      %v431 = vrot.slane %v429, 5
      %v432 = vsel %vm336, %v427, %v431
      %v434 = vshrl.u32 %v294, 16
      %v436 = vrot.slane %v434, 4
      %v437 = vshll.u32 %v294, 16
      %v439 = vrot.slane %v437, 5
      %v440 = vor.u32 %v436, %v439
      %v441 = vrot.slane %v440, 4
      %v443 = vshll.u32 %v295, 16
      %v445 = vrot.slane %v443, 5
      %v446 = vsel %vm336, %v441, %v445
      %v447 = vshrl.u32 %v295, 16
      %v449 = vrot.slane %v447, 4
      %v450 = vor.u32 %v449, %v445
      %v451 = vrot.slane %v450, 4
      %v453 = vshll.u32 %v322, 16
      %v455 = vrot.slane %v453, 5
      %v456 = vsel %vm336, %v451, %v455
      %v458 = vshrl.u32 %v296, 16
      %v460 = vrot.slane %v458, 4
      %v461 = vshll.u32 %v296, 16
      %v463 = vrot.slane %v461, 5
      %v464 = vor.u32 %v460, %v463
      %v465 = vrot.slane %v464, 4
      %v467 = vshll.u32 %v297, 16
      %v469 = vrot.slane %v467, 5
      %v470 = vsel %vm336, %v465, %v469
      %v471 = vshrl.u32 %v297, 16
      %v473 = vrot.slane %v471, 4
      %v474 = vor.u32 %v473, %v469
      %v475 = vrot.slane %v474, 4
      %v477 = vshll.u32 %v323, 16
      %v479 = vrot.slane %v477, 5
      %v480 = vsel %vm336, %v475, %v479
      %v482 = vshrl.u32 %v298, 16
      %v484 = vrot.slane %v482, 4
      %v485 = vshll.u32 %v298, 16
      %v487 = vrot.slane %v485, 5
      %v488 = vor.u32 %v484, %v487
      %v489 = vrot.slane %v488, 4
      %v491 = vshll.u32 %v299, 16
      %v493 = vrot.slane %v491, 5
      %v494 = vsel %vm336, %v489, %v493
      %v495 = vshrl.u32 %v299, 16
      %v497 = vrot.slane %v495, 4
      %v498 = vor.u32 %v497, %v493
      %v499 = vrot.slane %v498, 4
      %v501 = vshll.u32 %v324, 16
      %v503 = vrot.slane %v501, 5
      %v504 = vsel %vm336, %v499, %v503
      %v506 = vshrl.u32 %v300, 16
      %v508 = vrot.slane %v506, 4
      %v509 = vshll.u32 %v300, 16
      %v511 = vrot.slane %v509, 5
      %v512 = vor.u32 %v508, %v511
      %v513 = vrot.slane %v512, 4
      %v515 = vshll.u32 %v301, 16
      %v517 = vrot.slane %v515, 5
      %v518 = vsel %vm336, %v513, %v517
      %v519 = vshrl.u32 %v301, 16
      %v521 = vrot.slane %v519, 4
      %v522 = vor.u32 %v521, %v517
      %v523 = vrot.slane %v522, 4
      %v525 = vshll.u32 %v325, 16
      %v527 = vrot.slane %v525, 5
      %v528 = vsel %vm336, %v523, %v527
      %v530 = vshrl.u32 %v302, 16
      %v532 = vrot.slane %v530, 4
      %v533 = vshll.u32 %v302, 16
      %v535 = vrot.slane %v533, 5
      %v536 = vor.u32 %v532, %v535
      %v537 = vrot.slane %v536, 4
      %v539 = vshll.u32 %v303, 16
      %v541 = vrot.slane %v539, 5
      %v542 = vsel %vm336, %v537, %v541
      %v543 = vshrl.u32 %v303, 16
      %v545 = vrot.slane %v543, 4
      %v546 = vor.u32 %v545, %v541
      %v547 = vrot.slane %v546, 4
      %v549 = vshll.u32 %v326, 16
      %v551 = vrot.slane %v549, 5
      %v552 = vsel %vm336, %v547, %v551
      %v554 = vshrl.u32 %v304, 16
      %v556 = vrot.slane %v554, 4
      %v557 = vshll.u32 %v304, 16
      %v559 = vrot.slane %v557, 5
      %v560 = vor.u32 %v556, %v559
      %v561 = vrot.slane %v560, 4
      %v563 = vshll.u32 %v305, 16
      %v565 = vrot.slane %v563, 5
      %v566 = vsel %vm336, %v561, %v565
      %v567 = vshrl.u32 %v305, 16
      %v569 = vrot.slane %v567, 4
      %v570 = vor.u32 %v569, %v565
      %v571 = vrot.slane %v570, 4
      %v573 = vshll.u32 %v327, 16
      %v575 = vrot.slane %v573, 5
      %v576 = vsel %vm336, %v571, %v575
      %v578 = vshrl.u32 %v306, 16
      %v580 = vrot.slane %v578, 4
      %v581 = vshll.u32 %v306, 16
      %v583 = vrot.slane %v581, 5
      %v584 = vor.u32 %v580, %v583
      %v585 = vrot.slane %v584, 4
      %v587 = vshll.u32 %v307, 16
      %v589 = vrot.slane %v587, 5
      %v590 = vsel %vm336, %v585, %v589
      %v591 = vshrl.u32 %v307, 16
      %v593 = vrot.slane %v591, 4
      %v594 = vor.u32 %v593, %v589
      %v595 = vrot.slane %v594, 4
      %v597 = vshll.u32 %v328, 16
      %v599 = vrot.slane %v597, 5
      %v600 = vsel %vm336, %v595, %v599
      %v602 = vshrl.u32 %v308, 16
      %v604 = vrot.slane %v602, 4
      %v605 = vshll.u32 %v308, 16
      %v607 = vrot.slane %v605, 5
      %v608 = vor.u32 %v604, %v607
      %v609 = vrot.slane %v608, 4
      %v611 = vshll.u32 %v309, 16
      %v613 = vrot.slane %v611, 5
      %v614 = vsel %vm336, %v609, %v613
      %v615 = vshrl.u32 %v309, 16
      %v617 = vrot.slane %v615, 4
      %v618 = vor.u32 %v617, %v613
      %v619 = vrot.slane %v618, 4
      %v621 = vshll.u32 %v329, 16
      %v623 = vrot.slane %v621, 5
      %v624 = vsel %vm336, %v619, %v623
      %v626 = vshrl.u32 %v310, 16
      %v628 = vrot.slane %v626, 4
      %v629 = vshll.u32 %v310, 16
      %v631 = vrot.slane %v629, 5
      %v632 = vor.u32 %v628, %v631
      %v633 = vrot.slane %v632, 4
      %v635 = vshll.u32 %v311, 16
      %v637 = vrot.slane %v635, 5
      %v638 = vsel %vm336, %v633, %v637
      %v639 = vshrl.u32 %v311, 16
      %v641 = vrot.slane %v639, 4
      %v642 = vor.u32 %v641, %v637
      %v643 = vrot.slane %v642, 4
      %v645 = vshll.u32 %v330, 16
      %v647 = vrot.slane %v645, 5
      %v648 = vsel %vm336, %v643, %v647
      %v650 = vshrl.u32 %v312, 16
      %v652 = vrot.slane %v650, 4
      %v653 = vshll.u32 %v312, 16
      %v655 = vrot.slane %v653, 5
      %v656 = vor.u32 %v652, %v655
      %v657 = vrot.slane %v656, 4
      %v659 = vshll.u32 %v313, 16
      %v661 = vrot.slane %v659, 5
      %v662 = vsel %vm336, %v657, %v661
      %v663 = vshrl.u32 %v313, 16
      %v665 = vrot.slane %v663, 4
      %v666 = vor.u32 %v665, %v661
      %v667 = vrot.slane %v666, 4
      %v669 = vshll.u32 %v331, 16
      %v671 = vrot.slane %v669, 5
      %v672 = vsel %vm336, %v667, %v671
      %v674 = vshrl.u32 %v314, 16
      %v676 = vrot.slane %v674, 4
      %v677 = vshll.u32 %v314, 16
      %v679 = vrot.slane %v677, 5
      %v680 = vor.u32 %v676, %v679
      %v681 = vrot.slane %v680, 4
      %v683 = vshll.u32 %v315, 16
      %v685 = vrot.slane %v683, 5
      %v686 = vsel %vm336, %v681, %v685
      %v687 = vshrl.u32 %v315, 16
      %v689 = vrot.slane %v687, 4
      %v690 = vor.u32 %v689, %v685
      %v691 = vrot.slane %v690, 4
      %v693 = vshll.u32 %v332, 16
      %v695 = vrot.slane %v693, 5
      %v696 = vsel %vm336, %v691, %v695
      %v698 = vshrl.u32 %v316, 16
      %v700 = vrot.slane %v698, 4
      %v701 = vshll.u32 %v316, 16
      %v703 = vrot.slane %v701, 5
      %v704 = vor.u32 %v700, %v703
      %v705 = vrot.slane %v704, 4
      %v707 = vshll.u32 %v317, 16
      %v709 = vrot.slane %v707, 5
      %v710 = vsel %vm336, %v705, %v709
      %v711 = vshrl.u32 %v317, 16
      %v713 = vrot.slane %v711, 4
      %v714 = vor.u32 %v713, %v709
      %v715 = vrot.slane %v714, 4
      %v717 = vshll.u32 %v333, 16
      %v719 = vrot.slane %v717, 5
      %v720 = vsel %vm336, %v715, %v719
      %v721 = vld [vmem:[%s285] sm:$0xe]
      %v722 = vld [vmem:[%s285 + $0xc] sm:$0xe]
      %v723 = vld [vmem:[%s285 + $0x18] sm:$0xe]
      %v724 = vld [vmem:[%s285 + $0x24] sm:$0xe]
      %v725 = vld [vmem:[%s285 + $0x30] sm:$0xe]
      %v726 = vld [vmem:[%s285 + $0x3c] sm:$0xe]
      %v727 = vld [vmem:[%s285 + $0x48] sm:$0xe]
      %v728 = vld [vmem:[%s285 + $0x54] sm:$0xe]
      %v729 = vld [vmem:[%s285 + $0x60] sm:$0xe]
      %v730 = vld [vmem:[%s285 + $0x6c] sm:$0xe]
      %v731 = vld [vmem:[%s285 + $0x78] sm:$0xe]
      %v732 = vld [vmem:[%s285 + $0x84] sm:$0xe]
      %v733 = vld [vmem:[%s285 + $0x90] sm:$0xe]
      %v734 = vld [vmem:[%s285 + $0x9c] sm:$0xe]
      %v735 = vld [vmem:[%s285 + $0xa8] sm:$0xe]
      %v736 = vld [vmem:[%s285 + $0xb4] sm:$0xe]
      %vm785 = vcmask 1042432
      %vm786 = vcmask 1046532
      %vm787 = vmor %vm785, %vm786
      %v788 = vrot.slane %v721, 5
      %v789 = vrot.slane %v788, 4
      %v790 = vrot.slane %v287, 5
      %v791 = vsel %vm787, %v789, %v790
      %v792 = vrot.slane %v790, 4
      %v793 = vrot.slane %v318, 5
      %v794 = vsel %vm787, %v792, %v793
      %v795 = vrot.slane %v722, 5
      %v796 = vrot.slane %v795, 4
      %v797 = vrot.slane %v289, 5
      %v798 = vsel %vm787, %v796, %v797
      %v799 = vrot.slane %v797, 4
      %v800 = vrot.slane %v319, 5
      %v801 = vsel %vm787, %v799, %v800
      %v802 = vrot.slane %v723, 5
      %v803 = vrot.slane %v802, 4
      %v804 = vrot.slane %v291, 5
      %v805 = vsel %vm787, %v803, %v804
      %v806 = vrot.slane %v804, 4
      %v807 = vrot.slane %v320, 5
      %v808 = vsel %vm787, %v806, %v807
      %v809 = vrot.slane %v724, 5
      %v810 = vrot.slane %v809, 4
      %v811 = vrot.slane %v293, 5
      %v812 = vsel %vm787, %v810, %v811
      %v813 = vrot.slane %v811, 4
      %v814 = vrot.slane %v321, 5
      %v815 = vsel %vm787, %v813, %v814
      %v816 = vrot.slane %v725, 5
      %v817 = vrot.slane %v816, 4
      %v818 = vrot.slane %v295, 5
      %v819 = vsel %vm787, %v817, %v818
      %v820 = vrot.slane %v818, 4
      %v821 = vrot.slane %v322, 5
      %v822 = vsel %vm787, %v820, %v821
      %v823 = vrot.slane %v726, 5
      %v824 = vrot.slane %v823, 4
      %v825 = vrot.slane %v297, 5
      %v826 = vsel %vm787, %v824, %v825
      %v827 = vrot.slane %v825, 4
      %v828 = vrot.slane %v323, 5
      %v829 = vsel %vm787, %v827, %v828
      %v830 = vrot.slane %v727, 5
      %v831 = vrot.slane %v830, 4
      %v832 = vrot.slane %v299, 5
      %v833 = vsel %vm787, %v831, %v832
      %v834 = vrot.slane %v832, 4
      %v835 = vrot.slane %v324, 5
      %v836 = vsel %vm787, %v834, %v835
      %v837 = vrot.slane %v728, 5
      %v838 = vrot.slane %v837, 4
      %v839 = vrot.slane %v301, 5
      %v840 = vsel %vm787, %v838, %v839
      %v841 = vrot.slane %v839, 4
      %v842 = vrot.slane %v325, 5
      %v843 = vsel %vm787, %v841, %v842
      %v844 = vrot.slane %v729, 5
      %v845 = vrot.slane %v844, 4
      %v846 = vrot.slane %v303, 5
      %v847 = vsel %vm787, %v845, %v846
      %v848 = vrot.slane %v846, 4
      %v849 = vrot.slane %v326, 5
      %v850 = vsel %vm787, %v848, %v849
      %v851 = vrot.slane %v730, 5
      %v852 = vrot.slane %v851, 4
      %v853 = vrot.slane %v305, 5
      %v854 = vsel %vm787, %v852, %v853
      %v855 = vrot.slane %v853, 4
      %v856 = vrot.slane %v327, 5
      %v857 = vsel %vm787, %v855, %v856
      %v858 = vrot.slane %v731, 5
      %v859 = vrot.slane %v858, 4
      %v860 = vrot.slane %v307, 5
      %v861 = vsel %vm787, %v859, %v860
      %v862 = vrot.slane %v860, 4
      %v863 = vrot.slane %v328, 5
      %v864 = vsel %vm787, %v862, %v863
      %v865 = vrot.slane %v732, 5
      %v866 = vrot.slane %v865, 4
      %v867 = vrot.slane %v309, 5
      %v868 = vsel %vm787, %v866, %v867
      %v869 = vrot.slane %v867, 4
      %v870 = vrot.slane %v329, 5
      %v871 = vsel %vm787, %v869, %v870
      %v872 = vrot.slane %v733, 5
      %v873 = vrot.slane %v872, 4
      %v874 = vrot.slane %v311, 5
      %v875 = vsel %vm787, %v873, %v874
      %v876 = vrot.slane %v874, 4
      %v877 = vrot.slane %v330, 5
      %v878 = vsel %vm787, %v876, %v877
      %v879 = vrot.slane %v734, 5
      %v880 = vrot.slane %v879, 4
      %v881 = vrot.slane %v313, 5
      %v882 = vsel %vm787, %v880, %v881
      %v883 = vrot.slane %v881, 4
      %v884 = vrot.slane %v331, 5
      %v885 = vsel %vm787, %v883, %v884
      %v886 = vrot.slane %v735, 5
      %v887 = vrot.slane %v886, 4
      %v888 = vrot.slane %v315, 5
      %v889 = vsel %vm787, %v887, %v888
      %v890 = vrot.slane %v888, 4
      %v891 = vrot.slane %v332, 5
      %v892 = vsel %vm787, %v890, %v891
      %v893 = vrot.slane %v736, 5
      %v894 = vrot.slane %v893, 4
      %v895 = vrot.slane %v317, 5
      %v896 = vsel %vm787, %v894, %v895
      %v897 = vrot.slane %v895, 4
      %v898 = vrot.slane %v333, 5
      %v899 = vsel %vm787, %v897, %v898
      %s900 = sadd.s32 %s282, 1
      %s901 = smul.u32 %s900, 3
      %s902 = smul.addr %s901, 4
      %s903 = scalar_lea.vmem %s257, %s902
      %v904 = vld [vmem:[%s903] sm:$0xf]
      %v905 = vld [vmem:[%s903 + $0x4] sm:$0xf]
      %v906 = vld [vmem:[%s903 + $0xc] sm:$0xf]
      %v907 = vld [vmem:[%s903 + $0x10] sm:$0xf]
      %v908 = vld [vmem:[%s903 + $0x18] sm:$0xf]
      %v909 = vld [vmem:[%s903 + $0x1c] sm:$0xf]
      %v910 = vld [vmem:[%s903 + $0x24] sm:$0xf]
      %v911 = vld [vmem:[%s903 + $0x28] sm:$0xf]
      %v912 = vld [vmem:[%s903 + $0x30] sm:$0xf]
      %v913 = vld [vmem:[%s903 + $0x34] sm:$0xf]
      %v914 = vld [vmem:[%s903 + $0x3c] sm:$0xf]
      %v915 = vld [vmem:[%s903 + $0x40] sm:$0xf]
      %v916 = vld [vmem:[%s903 + $0x48] sm:$0xf]
      %v917 = vld [vmem:[%s903 + $0x4c] sm:$0xf]
      %v918 = vld [vmem:[%s903 + $0x54] sm:$0xf]
      %v919 = vld [vmem:[%s903 + $0x58] sm:$0xf]
      %v920 = vld [vmem:[%s903 + $0x60] sm:$0xf]
      %v921 = vld [vmem:[%s903 + $0x64] sm:$0xf]
      %v922 = vld [vmem:[%s903 + $0x6c] sm:$0xf]
      %v923 = vld [vmem:[%s903 + $0x70] sm:$0xf]
      %v924 = vld [vmem:[%s903 + $0x78] sm:$0xf]
      %v925 = vld [vmem:[%s903 + $0x7c] sm:$0xf]
      %v926 = vld [vmem:[%s903 + $0x84] sm:$0xf]
      %v927 = vld [vmem:[%s903 + $0x88] sm:$0xf]
      %v928 = vld [vmem:[%s903 + $0x90] sm:$0xf]
      %v929 = vld [vmem:[%s903 + $0x94] sm:$0xf]
      %v930 = vld [vmem:[%s903 + $0x9c] sm:$0xf]
      %v931 = vld [vmem:[%s903 + $0xa0] sm:$0xf]
      %v932 = vld [vmem:[%s903 + $0xa8] sm:$0xf]
      %v933 = vld [vmem:[%s903 + $0xac] sm:$0xf]
      %v934 = vld [vmem:[%s903 + $0xb4] sm:$0xf]
      %v935 = vld [vmem:[%s903 + $0xb8] sm:$0xf]
      %v936 = vld [vmem:[%s903 + $0x8] sm:$0x1]
      %v937 = vld [vmem:[%s903 + $0x14] sm:$0x1]
      %v938 = vld [vmem:[%s903 + $0x20] sm:$0x1]
      %v939 = vld [vmem:[%s903 + $0x2c] sm:$0x1]
      %v940 = vld [vmem:[%s903 + $0x38] sm:$0x1]
      %v941 = vld [vmem:[%s903 + $0x44] sm:$0x1]
      %v942 = vld [vmem:[%s903 + $0x50] sm:$0x1]
      %v943 = vld [vmem:[%s903 + $0x5c] sm:$0x1]
      %v944 = vld [vmem:[%s903 + $0x68] sm:$0x1]
      %v945 = vld [vmem:[%s903 + $0x74] sm:$0x1]
      %v946 = vld [vmem:[%s903 + $0x80] sm:$0x1]
      %v947 = vld [vmem:[%s903 + $0x8c] sm:$0x1]
      %v948 = vld [vmem:[%s903 + $0x98] sm:$0x1]
      %v949 = vld [vmem:[%s903 + $0xa4] sm:$0x1]
      %v950 = vld [vmem:[%s903 + $0xb0] sm:$0x1]
      %v951 = vld [vmem:[%s903 + $0xbc] sm:$0x1]
      %v953 = vshrl.u32 %v904, 16
      %v955 = vrot.slane %v953, 4
      %v956 = vshll.u32 %v904, 16
      %v958 = vrot.slane %v956, 5
      %v959 = vor.u32 %v955, %v958
      %v960 = vrot.slane %v959, 4
      %v962 = vshll.u32 %v905, 16
      %v964 = vrot.slane %v962, 5
      %v965 = vsel %vm336, %v960, %v964
      %v966 = vshrl.u32 %v905, 16
      %v968 = vrot.slane %v966, 4
      %v969 = vor.u32 %v968, %v964
      %v970 = vrot.slane %v969, 4
      %v972 = vshll.u32 %v936, 16
      %v974 = vrot.slane %v972, 5
      %v975 = vsel %vm336, %v970, %v974
      %v977 = vshrl.u32 %v906, 16
      %v979 = vrot.slane %v977, 4
      %v980 = vshll.u32 %v906, 16
      %v982 = vrot.slane %v980, 5
      %v983 = vor.u32 %v979, %v982
      %v984 = vrot.slane %v983, 4
      %v986 = vshll.u32 %v907, 16
      %v988 = vrot.slane %v986, 5
      %v989 = vsel %vm336, %v984, %v988
      %v990 = vshrl.u32 %v907, 16
      %v992 = vrot.slane %v990, 4
      %v993 = vor.u32 %v992, %v988
      %v994 = vrot.slane %v993, 4
      %v996 = vshll.u32 %v937, 16
      %v998 = vrot.slane %v996, 5
      %v999 = vsel %vm336, %v994, %v998
      %v1001 = vshrl.u32 %v908, 16
      %v1003 = vrot.slane %v1001, 4
      %v1004 = vshll.u32 %v908, 16
      %v1006 = vrot.slane %v1004, 5
      %v1007 = vor.u32 %v1003, %v1006
      %v1008 = vrot.slane %v1007, 4
      %v1010 = vshll.u32 %v909, 16
      %v1012 = vrot.slane %v1010, 5
      %v1013 = vsel %vm336, %v1008, %v1012
      %v1014 = vshrl.u32 %v909, 16
      %v1016 = vrot.slane %v1014, 4
      %v1017 = vor.u32 %v1016, %v1012
      %v1018 = vrot.slane %v1017, 4
      %v1020 = vshll.u32 %v938, 16
      %v1022 = vrot.slane %v1020, 5
      %v1023 = vsel %vm336, %v1018, %v1022
      %v1025 = vshrl.u32 %v910, 16
      %v1027 = vrot.slane %v1025, 4
      %v1028 = vshll.u32 %v910, 16
      %v1030 = vrot.slane %v1028, 5
      %v1031 = vor.u32 %v1027, %v1030
      %v1032 = vrot.slane %v1031, 4
      %v1034 = vshll.u32 %v911, 16
      %v1036 = vrot.slane %v1034, 5
      %v1037 = vsel %vm336, %v1032, %v1036
      %v1038 = vshrl.u32 %v911, 16
      %v1040 = vrot.slane %v1038, 4
      %v1041 = vor.u32 %v1040, %v1036
      %v1042 = vrot.slane %v1041, 4
      %v1044 = vshll.u32 %v939, 16
      %v1046 = vrot.slane %v1044, 5
      %v1047 = vsel %vm336, %v1042, %v1046
      %v1049 = vshrl.u32 %v912, 16
      %v1051 = vrot.slane %v1049, 4
      %v1052 = vshll.u32 %v912, 16
      %v1054 = vrot.slane %v1052, 5
      %v1055 = vor.u32 %v1051, %v1054
      %v1056 = vrot.slane %v1055, 4
      %v1058 = vshll.u32 %v913, 16
      %v1060 = vrot.slane %v1058, 5
      %v1061 = vsel %vm336, %v1056, %v1060
      %v1062 = vshrl.u32 %v913, 16
      %v1064 = vrot.slane %v1062, 4
      %v1065 = vor.u32 %v1064, %v1060
      %v1066 = vrot.slane %v1065, 4
      %v1068 = vshll.u32 %v940, 16
      %v1070 = vrot.slane %v1068, 5
      %v1071 = vsel %vm336, %v1066, %v1070
      %v1073 = vshrl.u32 %v914, 16
      %v1075 = vrot.slane %v1073, 4
      %v1076 = vshll.u32 %v914, 16
      %v1078 = vrot.slane %v1076, 5
      %v1079 = vor.u32 %v1075, %v1078
      %v1080 = vrot.slane %v1079, 4
      %v1082 = vshll.u32 %v915, 16
      %v1084 = vrot.slane %v1082, 5
      %v1085 = vsel %vm336, %v1080, %v1084
      %v1086 = vshrl.u32 %v915, 16
      %v1088 = vrot.slane %v1086, 4
      %v1089 = vor.u32 %v1088, %v1084
      %v1090 = vrot.slane %v1089, 4
      %v1092 = vshll.u32 %v941, 16
      %v1094 = vrot.slane %v1092, 5
      %v1095 = vsel %vm336, %v1090, %v1094
      %v1097 = vshrl.u32 %v916, 16
      %v1099 = vrot.slane %v1097, 4
      %v1100 = vshll.u32 %v916, 16
      %v1102 = vrot.slane %v1100, 5
      %v1103 = vor.u32 %v1099, %v1102
      %v1104 = vrot.slane %v1103, 4
      %v1106 = vshll.u32 %v917, 16
      %v1108 = vrot.slane %v1106, 5
      %v1109 = vsel %vm336, %v1104, %v1108
      %v1110 = vshrl.u32 %v917, 16
      %v1112 = vrot.slane %v1110, 4
      %v1113 = vor.u32 %v1112, %v1108
      %v1114 = vrot.slane %v1113, 4
      %v1116 = vshll.u32 %v942, 16
      %v1118 = vrot.slane %v1116, 5
      %v1119 = vsel %vm336, %v1114, %v1118
      %v1121 = vshrl.u32 %v918, 16
      %v1123 = vrot.slane %v1121, 4
      %v1124 = vshll.u32 %v918, 16
      %v1126 = vrot.slane %v1124, 5
      %v1127 = vor.u32 %v1123, %v1126
      %v1128 = vrot.slane %v1127, 4
      %v1130 = vshll.u32 %v919, 16
      %v1132 = vrot.slane %v1130, 5
      %v1133 = vsel %vm336, %v1128, %v1132
      %v1134 = vshrl.u32 %v919, 16
      %v1136 = vrot.slane %v1134, 4
      %v1137 = vor.u32 %v1136, %v1132
      %v1138 = vrot.slane %v1137, 4
      %v1140 = vshll.u32 %v943, 16
      %v1142 = vrot.slane %v1140, 5
      %v1143 = vsel %vm336, %v1138, %v1142
      %v1145 = vshrl.u32 %v920, 16
      %v1147 = vrot.slane %v1145, 4
      %v1148 = vshll.u32 %v920, 16
      %v1150 = vrot.slane %v1148, 5
      %v1151 = vor.u32 %v1147, %v1150
      %v1152 = vrot.slane %v1151, 4
      %v1154 = vshll.u32 %v921, 16
      %v1156 = vrot.slane %v1154, 5
      %v1157 = vsel %vm336, %v1152, %v1156
      %v1158 = vshrl.u32 %v921, 16
      %v1160 = vrot.slane %v1158, 4
      %v1161 = vor.u32 %v1160, %v1156
      %v1162 = vrot.slane %v1161, 4
      %v1164 = vshll.u32 %v944, 16
      %v1166 = vrot.slane %v1164, 5
      %v1167 = vsel %vm336, %v1162, %v1166
      %v1169 = vshrl.u32 %v922, 16
      %v1171 = vrot.slane %v1169, 4
      %v1172 = vshll.u32 %v922, 16
      %v1174 = vrot.slane %v1172, 5
      %v1175 = vor.u32 %v1171, %v1174
      %v1176 = vrot.slane %v1175, 4
      %v1178 = vshll.u32 %v923, 16
      %v1180 = vrot.slane %v1178, 5
      %v1181 = vsel %vm336, %v1176, %v1180
      %v1182 = vshrl.u32 %v923, 16
      %v1184 = vrot.slane %v1182, 4
      %v1185 = vor.u32 %v1184, %v1180
      %v1186 = vrot.slane %v1185, 4
      %v1188 = vshll.u32 %v945, 16
      %v1190 = vrot.slane %v1188, 5
      %v1191 = vsel %vm336, %v1186, %v1190
      %v1193 = vshrl.u32 %v924, 16
      %v1195 = vrot.slane %v1193, 4
      %v1196 = vshll.u32 %v924, 16
      %v1198 = vrot.slane %v1196, 5
      %v1199 = vor.u32 %v1195, %v1198
      %v1200 = vrot.slane %v1199, 4
      %v1202 = vshll.u32 %v925, 16
      %v1204 = vrot.slane %v1202, 5
      %v1205 = vsel %vm336, %v1200, %v1204
      %v1206 = vshrl.u32 %v925, 16
      %v1208 = vrot.slane %v1206, 4
      %v1209 = vor.u32 %v1208, %v1204
      %v1210 = vrot.slane %v1209, 4
      %v1212 = vshll.u32 %v946, 16
      %v1214 = vrot.slane %v1212, 5
      %v1215 = vsel %vm336, %v1210, %v1214
      %v1217 = vshrl.u32 %v926, 16
      %v1219 = vrot.slane %v1217, 4
      %v1220 = vshll.u32 %v926, 16
      %v1222 = vrot.slane %v1220, 5
      %v1223 = vor.u32 %v1219, %v1222
      %v1224 = vrot.slane %v1223, 4
      %v1226 = vshll.u32 %v927, 16
      %v1228 = vrot.slane %v1226, 5
      %v1229 = vsel %vm336, %v1224, %v1228
      %v1230 = vshrl.u32 %v927, 16
      %v1232 = vrot.slane %v1230, 4
      %v1233 = vor.u32 %v1232, %v1228
      %v1234 = vrot.slane %v1233, 4
      %v1236 = vshll.u32 %v947, 16
      %v1238 = vrot.slane %v1236, 5
      %v1239 = vsel %vm336, %v1234, %v1238
      %v1241 = vshrl.u32 %v928, 16
      %v1243 = vrot.slane %v1241, 4
      %v1244 = vshll.u32 %v928, 16
      %v1246 = vrot.slane %v1244, 5
      %v1247 = vor.u32 %v1243, %v1246
      %v1248 = vrot.slane %v1247, 4
      %v1250 = vshll.u32 %v929, 16
      %v1252 = vrot.slane %v1250, 5
      %v1253 = vsel %vm336, %v1248, %v1252
      %v1254 = vshrl.u32 %v929, 16
      %v1256 = vrot.slane %v1254, 4
      %v1257 = vor.u32 %v1256, %v1252
      %v1258 = vrot.slane %v1257, 4
      %v1260 = vshll.u32 %v948, 16
      %v1262 = vrot.slane %v1260, 5
      %v1263 = vsel %vm336, %v1258, %v1262
      %v1265 = vshrl.u32 %v930, 16
      %v1267 = vrot.slane %v1265, 4
      %v1268 = vshll.u32 %v930, 16
      %v1270 = vrot.slane %v1268, 5
      %v1271 = vor.u32 %v1267, %v1270
      %v1272 = vrot.slane %v1271, 4
      %v1274 = vshll.u32 %v931, 16
      %v1276 = vrot.slane %v1274, 5
      %v1277 = vsel %vm336, %v1272, %v1276
      %v1278 = vshrl.u32 %v931, 16
      %v1280 = vrot.slane %v1278, 4
      %v1281 = vor.u32 %v1280, %v1276
      %v1282 = vrot.slane %v1281, 4
      %v1284 = vshll.u32 %v949, 16
      %v1286 = vrot.slane %v1284, 5
      %v1287 = vsel %vm336, %v1282, %v1286
      %v1289 = vshrl.u32 %v932, 16
      %v1291 = vrot.slane %v1289, 4
      %v1292 = vshll.u32 %v932, 16
      %v1294 = vrot.slane %v1292, 5
      %v1295 = vor.u32 %v1291, %v1294
      %v1296 = vrot.slane %v1295, 4
      %v1298 = vshll.u32 %v933, 16
      %v1300 = vrot.slane %v1298, 5
      %v1301 = vsel %vm336, %v1296, %v1300
      %v1302 = vshrl.u32 %v933, 16
      %v1304 = vrot.slane %v1302, 4
      %v1305 = vor.u32 %v1304, %v1300
      %v1306 = vrot.slane %v1305, 4
      %v1308 = vshll.u32 %v950, 16
      %v1310 = vrot.slane %v1308, 5
      %v1311 = vsel %vm336, %v1306, %v1310
      %v1313 = vshrl.u32 %v934, 16
      %v1315 = vrot.slane %v1313, 4
      %v1316 = vshll.u32 %v934, 16
      %v1318 = vrot.slane %v1316, 5
      %v1319 = vor.u32 %v1315, %v1318
      %v1320 = vrot.slane %v1319, 4
      %v1322 = vshll.u32 %v935, 16
      %v1324 = vrot.slane %v1322, 5
      %v1325 = vsel %vm336, %v1320, %v1324
      %v1326 = vshrl.u32 %v935, 16
      %v1328 = vrot.slane %v1326, 4
      %v1329 = vor.u32 %v1328, %v1324
      %v1330 = vrot.slane %v1329, 4
      %v1332 = vshll.u32 %v951, 16
      %v1334 = vrot.slane %v1332, 5
      %v1335 = vsel %vm336, %v1330, %v1334
      %v1336 = vld [vmem:[%s903] sm:$0xe]
      %v1337 = vld [vmem:[%s903 + $0xc] sm:$0xe]
      %v1338 = vld [vmem:[%s903 + $0x18] sm:$0xe]
      %v1339 = vld [vmem:[%s903 + $0x24] sm:$0xe]
      %v1340 = vld [vmem:[%s903 + $0x30] sm:$0xe]
      %v1341 = vld [vmem:[%s903 + $0x3c] sm:$0xe]
      %v1342 = vld [vmem:[%s903 + $0x48] sm:$0xe]
      %v1343 = vld [vmem:[%s903 + $0x54] sm:$0xe]
      %v1344 = vld [vmem:[%s903 + $0x60] sm:$0xe]
      %v1345 = vld [vmem:[%s903 + $0x6c] sm:$0xe]
      %v1346 = vld [vmem:[%s903 + $0x78] sm:$0xe]
      %v1347 = vld [vmem:[%s903 + $0x84] sm:$0xe]
      %v1348 = vld [vmem:[%s903 + $0x90] sm:$0xe]
      %v1349 = vld [vmem:[%s903 + $0x9c] sm:$0xe]
      %v1350 = vld [vmem:[%s903 + $0xa8] sm:$0xe]
      %v1351 = vld [vmem:[%s903 + $0xb4] sm:$0xe]
      %v1400 = vrot.slane %v1336, 5
      %v1401 = vrot.slane %v1400, 4
      %v1402 = vrot.slane %v905, 5
      %v1403 = vsel %vm787, %v1401, %v1402
      %v1404 = vrot.slane %v1402, 4
      %v1405 = vrot.slane %v936, 5
      %v1406 = vsel %vm787, %v1404, %v1405
      %v1407 = vrot.slane %v1337, 5
      %v1408 = vrot.slane %v1407, 4
      %v1409 = vrot.slane %v907, 5
      %v1410 = vsel %vm787, %v1408, %v1409
      %v1411 = vrot.slane %v1409, 4
      %v1412 = vrot.slane %v937, 5
      %v1413 = vsel %vm787, %v1411, %v1412
      %v1414 = vrot.slane %v1338, 5
      %v1415 = vrot.slane %v1414, 4
      %v1416 = vrot.slane %v909, 5
      %v1417 = vsel %vm787, %v1415, %v1416
      %v1418 = vrot.slane %v1416, 4
      %v1419 = vrot.slane %v938, 5
      %v1420 = vsel %vm787, %v1418, %v1419
      %v1421 = vrot.slane %v1339, 5
      %v1422 = vrot.slane %v1421, 4
      %v1423 = vrot.slane %v911, 5
      %v1424 = vsel %vm787, %v1422, %v1423
      %v1425 = vrot.slane %v1423, 4
      %v1426 = vrot.slane %v939, 5
      %v1427 = vsel %vm787, %v1425, %v1426
      %v1428 = vrot.slane %v1340, 5
      %v1429 = vrot.slane %v1428, 4
      %v1430 = vrot.slane %v913, 5
      %v1431 = vsel %vm787, %v1429, %v1430
      %v1432 = vrot.slane %v1430, 4
      %v1433 = vrot.slane %v940, 5
      %v1434 = vsel %vm787, %v1432, %v1433
      %v1435 = vrot.slane %v1341, 5
      %v1436 = vrot.slane %v1435, 4
      %v1437 = vrot.slane %v915, 5
      %v1438 = vsel %vm787, %v1436, %v1437
      %v1439 = vrot.slane %v1437, 4
      %v1440 = vrot.slane %v941, 5
      %v1441 = vsel %vm787, %v1439, %v1440
      %v1442 = vrot.slane %v1342, 5
      %v1443 = vrot.slane %v1442, 4
      %v1444 = vrot.slane %v917, 5
      %v1445 = vsel %vm787, %v1443, %v1444
      %v1446 = vrot.slane %v1444, 4
      %v1447 = vrot.slane %v942, 5
      %v1448 = vsel %vm787, %v1446, %v1447
      %v1449 = vrot.slane %v1343, 5
      %v1450 = vrot.slane %v1449, 4
      %v1451 = vrot.slane %v919, 5
      %v1452 = vsel %vm787, %v1450, %v1451
      %v1453 = vrot.slane %v1451, 4
      %v1454 = vrot.slane %v943, 5
      %v1455 = vsel %vm787, %v1453, %v1454
      %v1456 = vrot.slane %v1344, 5
      %v1457 = vrot.slane %v1456, 4
      %v1458 = vrot.slane %v921, 5
      %v1459 = vsel %vm787, %v1457, %v1458
      %v1460 = vrot.slane %v1458, 4
      %v1461 = vrot.slane %v944, 5
      %v1462 = vsel %vm787, %v1460, %v1461
      %v1463 = vrot.slane %v1345, 5
      %v1464 = vrot.slane %v1463, 4
      %v1465 = vrot.slane %v923, 5
      %v1466 = vsel %vm787, %v1464, %v1465
      %v1467 = vrot.slane %v1465, 4
      %v1468 = vrot.slane %v945, 5
      %v1469 = vsel %vm787, %v1467, %v1468
      %v1470 = vrot.slane %v1346, 5
      %v1471 = vrot.slane %v1470, 4
      %v1472 = vrot.slane %v925, 5
      %v1473 = vsel %vm787, %v1471, %v1472
      %v1474 = vrot.slane %v1472, 4
      %v1475 = vrot.slane %v946, 5
      %v1476 = vsel %vm787, %v1474, %v1475
      %v1477 = vrot.slane %v1347, 5
      %v1478 = vrot.slane %v1477, 4
      %v1479 = vrot.slane %v927, 5
      %v1480 = vsel %vm787, %v1478, %v1479
      %v1481 = vrot.slane %v1479, 4
      %v1482 = vrot.slane %v947, 5
      %v1483 = vsel %vm787, %v1481, %v1482
      %v1484 = vrot.slane %v1348, 5
      %v1485 = vrot.slane %v1484, 4
      %v1486 = vrot.slane %v929, 5
      %v1487 = vsel %vm787, %v1485, %v1486
      %v1488 = vrot.slane %v1486, 4
      %v1489 = vrot.slane %v948, 5
      %v1490 = vsel %vm787, %v1488, %v1489
      %v1491 = vrot.slane %v1349, 5
      %v1492 = vrot.slane %v1491, 4
      %v1493 = vrot.slane %v931, 5
      %v1494 = vsel %vm787, %v1492, %v1493
      %v1495 = vrot.slane %v1493, 4
      %v1496 = vrot.slane %v949, 5
      %v1497 = vsel %vm787, %v1495, %v1496
      %v1498 = vrot.slane %v1350, 5
      %v1499 = vrot.slane %v1498, 4
      %v1500 = vrot.slane %v933, 5
      %v1501 = vsel %vm787, %v1499, %v1500
      %v1502 = vrot.slane %v1500, 4
      %v1503 = vrot.slane %v950, 5
      %v1504 = vsel %vm787, %v1502, %v1503
      %v1505 = vrot.slane %v1351, 5
      %v1506 = vrot.slane %v1505, 4
      %v1507 = vrot.slane %v935, 5
      %v1508 = vsel %vm787, %v1506, %v1507
      %v1509 = vrot.slane %v1507, 4
      %v1510 = vrot.slane %v951, 5
      %v1511 = vsel %vm787, %v1509, %v1510
      %s1512 = sadd.s32 %s282, 2
      %s1513 = smul.u32 %s1512, 3
      %s1514 = smul.addr %s1513, 4
      %s1515 = scalar_lea.vmem %s257, %s1514
      %v1516 = vld [vmem:[%s1515] sm:$0xf]
      %v1517 = vld [vmem:[%s1515 + $0x4] sm:$0xf]
      %v1518 = vld [vmem:[%s1515 + $0xc] sm:$0xf]
      %v1519 = vld [vmem:[%s1515 + $0x10] sm:$0xf]
      %v1520 = vld [vmem:[%s1515 + $0x18] sm:$0xf]
      %v1521 = vld [vmem:[%s1515 + $0x1c] sm:$0xf]
      %v1522 = vld [vmem:[%s1515 + $0x24] sm:$0xf]
      %v1523 = vld [vmem:[%s1515 + $0x28] sm:$0xf]
      %v1524 = vld [vmem:[%s1515 + $0x30] sm:$0xf]
      %v1525 = vld [vmem:[%s1515 + $0x34] sm:$0xf]
      %v1526 = vld [vmem:[%s1515 + $0x3c] sm:$0xf]
      %v1527 = vld [vmem:[%s1515 + $0x40] sm:$0xf]
      %v1528 = vld [vmem:[%s1515 + $0x48] sm:$0xf]
      %v1529 = vld [vmem:[%s1515 + $0x4c] sm:$0xf]
      %v1530 = vld [vmem:[%s1515 + $0x54] sm:$0xf]
      %v1531 = vld [vmem:[%s1515 + $0x58] sm:$0xf]
      %v1532 = vld [vmem:[%s1515 + $0x60] sm:$0xf]
      %v1533 = vld [vmem:[%s1515 + $0x64] sm:$0xf]
      %v1534 = vld [vmem:[%s1515 + $0x6c] sm:$0xf]
      %v1535 = vld [vmem:[%s1515 + $0x70] sm:$0xf]
      %v1536 = vld [vmem:[%s1515 + $0x78] sm:$0xf]
      %v1537 = vld [vmem:[%s1515 + $0x7c] sm:$0xf]
      %v1538 = vld [vmem:[%s1515 + $0x84] sm:$0xf]
      %v1539 = vld [vmem:[%s1515 + $0x88] sm:$0xf]
      %v1540 = vld [vmem:[%s1515 + $0x90] sm:$0xf]
      %v1541 = vld [vmem:[%s1515 + $0x94] sm:$0xf]
      %v1542 = vld [vmem:[%s1515 + $0x9c] sm:$0xf]
      %v1543 = vld [vmem:[%s1515 + $0xa0] sm:$0xf]
      %v1544 = vld [vmem:[%s1515 + $0xa8] sm:$0xf]
      %v1545 = vld [vmem:[%s1515 + $0xac] sm:$0xf]
      %v1546 = vld [vmem:[%s1515 + $0xb4] sm:$0xf]
      %v1547 = vld [vmem:[%s1515 + $0xb8] sm:$0xf]
      %v1548 = vld [vmem:[%s1515 + $0x8] sm:$0x1]
      %v1549 = vld [vmem:[%s1515 + $0x14] sm:$0x1]
      %v1550 = vld [vmem:[%s1515 + $0x20] sm:$0x1]
      %v1551 = vld [vmem:[%s1515 + $0x2c] sm:$0x1]
      %v1552 = vld [vmem:[%s1515 + $0x38] sm:$0x1]
      %v1553 = vld [vmem:[%s1515 + $0x44] sm:$0x1]
      %v1554 = vld [vmem:[%s1515 + $0x50] sm:$0x1]
      %v1555 = vld [vmem:[%s1515 + $0x5c] sm:$0x1]
      %v1556 = vld [vmem:[%s1515 + $0x68] sm:$0x1]
      %v1557 = vld [vmem:[%s1515 + $0x74] sm:$0x1]
      %v1558 = vld [vmem:[%s1515 + $0x80] sm:$0x1]
      %v1559 = vld [vmem:[%s1515 + $0x8c] sm:$0x1]
      %v1560 = vld [vmem:[%s1515 + $0x98] sm:$0x1]
      %v1561 = vld [vmem:[%s1515 + $0xa4] sm:$0x1]
      %v1562 = vld [vmem:[%s1515 + $0xb0] sm:$0x1]
      %v1563 = vld [vmem:[%s1515 + $0xbc] sm:$0x1]
      %v1565 = vshrl.u32 %v1516, 16
      %v1567 = vrot.slane %v1565, 4
      %v1568 = vshll.u32 %v1516, 16
      %v1570 = vrot.slane %v1568, 5
      %v1571 = vor.u32 %v1567, %v1570
      %v1572 = vrot.slane %v1571, 4
      %v1574 = vshll.u32 %v1517, 16
      %v1576 = vrot.slane %v1574, 5
      %v1577 = vsel %vm336, %v1572, %v1576
      %v1578 = vshrl.u32 %v1517, 16
      %v1580 = vrot.slane %v1578, 4
      %v1581 = vor.u32 %v1580, %v1576
      %v1582 = vrot.slane %v1581, 4
      %v1584 = vshll.u32 %v1548, 16
      %v1586 = vrot.slane %v1584, 5
      %v1587 = vsel %vm336, %v1582, %v1586
      %v1589 = vshrl.u32 %v1518, 16
      %v1591 = vrot.slane %v1589, 4
      %v1592 = vshll.u32 %v1518, 16
      %v1594 = vrot.slane %v1592, 5
      %v1595 = vor.u32 %v1591, %v1594
      %v1596 = vrot.slane %v1595, 4
      %v1598 = vshll.u32 %v1519, 16
      %v1600 = vrot.slane %v1598, 5
      %v1601 = vsel %vm336, %v1596, %v1600
      %v1602 = vshrl.u32 %v1519, 16
      %v1604 = vrot.slane %v1602, 4
      %v1605 = vor.u32 %v1604, %v1600
      %v1606 = vrot.slane %v1605, 4
      %v1608 = vshll.u32 %v1549, 16
      %v1610 = vrot.slane %v1608, 5
      %v1611 = vsel %vm336, %v1606, %v1610
      %v1613 = vshrl.u32 %v1520, 16
      %v1615 = vrot.slane %v1613, 4
      %v1616 = vshll.u32 %v1520, 16
      %v1618 = vrot.slane %v1616, 5
      %v1619 = vor.u32 %v1615, %v1618
      %v1620 = vrot.slane %v1619, 4
      %v1622 = vshll.u32 %v1521, 16
      %v1624 = vrot.slane %v1622, 5
      %v1625 = vsel %vm336, %v1620, %v1624
      %v1626 = vshrl.u32 %v1521, 16
      %v1628 = vrot.slane %v1626, 4
      %v1629 = vor.u32 %v1628, %v1624
      %v1630 = vrot.slane %v1629, 4
      %v1632 = vshll.u32 %v1550, 16
      %v1634 = vrot.slane %v1632, 5
      %v1635 = vsel %vm336, %v1630, %v1634
      %v1637 = vshrl.u32 %v1522, 16
      %v1639 = vrot.slane %v1637, 4
      %v1640 = vshll.u32 %v1522, 16
      %v1642 = vrot.slane %v1640, 5
      %v1643 = vor.u32 %v1639, %v1642
      %v1644 = vrot.slane %v1643, 4
      %v1646 = vshll.u32 %v1523, 16
      %v1648 = vrot.slane %v1646, 5
      %v1649 = vsel %vm336, %v1644, %v1648
      %v1650 = vshrl.u32 %v1523, 16
      %v1652 = vrot.slane %v1650, 4
      %v1653 = vor.u32 %v1652, %v1648
      %v1654 = vrot.slane %v1653, 4
      %v1656 = vshll.u32 %v1551, 16
      %v1658 = vrot.slane %v1656, 5
      %v1659 = vsel %vm336, %v1654, %v1658
      %v1661 = vshrl.u32 %v1524, 16
      %v1663 = vrot.slane %v1661, 4
      %v1664 = vshll.u32 %v1524, 16
      %v1666 = vrot.slane %v1664, 5
      %v1667 = vor.u32 %v1663, %v1666
      %v1668 = vrot.slane %v1667, 4
      %v1670 = vshll.u32 %v1525, 16
      %v1672 = vrot.slane %v1670, 5
      %v1673 = vsel %vm336, %v1668, %v1672
      %v1674 = vshrl.u32 %v1525, 16
      %v1676 = vrot.slane %v1674, 4
      %v1677 = vor.u32 %v1676, %v1672
      %v1678 = vrot.slane %v1677, 4
      %v1680 = vshll.u32 %v1552, 16
      %v1682 = vrot.slane %v1680, 5
      %v1683 = vsel %vm336, %v1678, %v1682
      %v1685 = vshrl.u32 %v1526, 16
      %v1687 = vrot.slane %v1685, 4
      %v1688 = vshll.u32 %v1526, 16
      %v1690 = vrot.slane %v1688, 5
      %v1691 = vor.u32 %v1687, %v1690
      %v1692 = vrot.slane %v1691, 4
      %v1694 = vshll.u32 %v1527, 16
      %v1696 = vrot.slane %v1694, 5
      %v1697 = vsel %vm336, %v1692, %v1696
      %v1698 = vshrl.u32 %v1527, 16
      %v1700 = vrot.slane %v1698, 4
      %v1701 = vor.u32 %v1700, %v1696
      %v1702 = vrot.slane %v1701, 4
      %v1704 = vshll.u32 %v1553, 16
      %v1706 = vrot.slane %v1704, 5
      %v1707 = vsel %vm336, %v1702, %v1706
      %v1709 = vshrl.u32 %v1528, 16
      %v1711 = vrot.slane %v1709, 4
      %v1712 = vshll.u32 %v1528, 16
      %v1714 = vrot.slane %v1712, 5
      %v1715 = vor.u32 %v1711, %v1714
      %v1716 = vrot.slane %v1715, 4
      %v1718 = vshll.u32 %v1529, 16
      %v1720 = vrot.slane %v1718, 5
      %v1721 = vsel %vm336, %v1716, %v1720
      %v1722 = vshrl.u32 %v1529, 16
      %v1724 = vrot.slane %v1722, 4
      %v1725 = vor.u32 %v1724, %v1720
      %v1726 = vrot.slane %v1725, 4
      %v1728 = vshll.u32 %v1554, 16
      %v1730 = vrot.slane %v1728, 5
      %v1731 = vsel %vm336, %v1726, %v1730
      %v1733 = vshrl.u32 %v1530, 16
      %v1735 = vrot.slane %v1733, 4
      %v1736 = vshll.u32 %v1530, 16
      %v1738 = vrot.slane %v1736, 5
      %v1739 = vor.u32 %v1735, %v1738
      %v1740 = vrot.slane %v1739, 4
      %v1742 = vshll.u32 %v1531, 16
      %v1744 = vrot.slane %v1742, 5
      %v1745 = vsel %vm336, %v1740, %v1744
      %v1746 = vshrl.u32 %v1531, 16
      %v1748 = vrot.slane %v1746, 4
      %v1749 = vor.u32 %v1748, %v1744
      %v1750 = vrot.slane %v1749, 4
      %v1752 = vshll.u32 %v1555, 16
      %v1754 = vrot.slane %v1752, 5
      %v1755 = vsel %vm336, %v1750, %v1754
      %v1757 = vshrl.u32 %v1532, 16
      %v1759 = vrot.slane %v1757, 4
      %v1760 = vshll.u32 %v1532, 16
      %v1762 = vrot.slane %v1760, 5
      %v1763 = vor.u32 %v1759, %v1762
      %v1764 = vrot.slane %v1763, 4
      %v1766 = vshll.u32 %v1533, 16
      %v1768 = vrot.slane %v1766, 5
      %v1769 = vsel %vm336, %v1764, %v1768
      %v1770 = vshrl.u32 %v1533, 16
      %v1772 = vrot.slane %v1770, 4
      %v1773 = vor.u32 %v1772, %v1768
      %v1774 = vrot.slane %v1773, 4
      %v1776 = vshll.u32 %v1556, 16
      %v1778 = vrot.slane %v1776, 5
      %v1779 = vsel %vm336, %v1774, %v1778
      %v1781 = vshrl.u32 %v1534, 16
      %v1783 = vrot.slane %v1781, 4
      %v1784 = vshll.u32 %v1534, 16
      %v1786 = vrot.slane %v1784, 5
      %v1787 = vor.u32 %v1783, %v1786
      %v1788 = vrot.slane %v1787, 4
      %v1790 = vshll.u32 %v1535, 16
      %v1792 = vrot.slane %v1790, 5
      %v1793 = vsel %vm336, %v1788, %v1792
      %v1794 = vshrl.u32 %v1535, 16
      %v1796 = vrot.slane %v1794, 4
      %v1797 = vor.u32 %v1796, %v1792
      %v1798 = vrot.slane %v1797, 4
      %v1800 = vshll.u32 %v1557, 16
      %v1802 = vrot.slane %v1800, 5
      %v1803 = vsel %vm336, %v1798, %v1802
      %v1805 = vshrl.u32 %v1536, 16
      %v1807 = vrot.slane %v1805, 4
      %v1808 = vshll.u32 %v1536, 16
      %v1810 = vrot.slane %v1808, 5
      %v1811 = vor.u32 %v1807, %v1810
      %v1812 = vrot.slane %v1811, 4
      %v1814 = vshll.u32 %v1537, 16
      %v1816 = vrot.slane %v1814, 5
      %v1817 = vsel %vm336, %v1812, %v1816
      %v1818 = vshrl.u32 %v1537, 16
      %v1820 = vrot.slane %v1818, 4
      %v1821 = vor.u32 %v1820, %v1816
      %v1822 = vrot.slane %v1821, 4
      %v1824 = vshll.u32 %v1558, 16
      %v1826 = vrot.slane %v1824, 5
      %v1827 = vsel %vm336, %v1822, %v1826
      %v1829 = vshrl.u32 %v1538, 16
      %v1831 = vrot.slane %v1829, 4
      %v1832 = vshll.u32 %v1538, 16
      %v1834 = vrot.slane %v1832, 5
      %v1835 = vor.u32 %v1831, %v1834
      %v1836 = vrot.slane %v1835, 4
      %v1838 = vshll.u32 %v1539, 16
      %v1840 = vrot.slane %v1838, 5
      %v1841 = vsel %vm336, %v1836, %v1840
      %v1842 = vshrl.u32 %v1539, 16
      %v1844 = vrot.slane %v1842, 4
      %v1845 = vor.u32 %v1844, %v1840
      %v1846 = vrot.slane %v1845, 4
      %v1848 = vshll.u32 %v1559, 16
      %v1850 = vrot.slane %v1848, 5
      %v1851 = vsel %vm336, %v1846, %v1850
      %v1853 = vshrl.u32 %v1540, 16
      %v1855 = vrot.slane %v1853, 4
      %v1856 = vshll.u32 %v1540, 16
      %v1858 = vrot.slane %v1856, 5
      %v1859 = vor.u32 %v1855, %v1858
      %v1860 = vrot.slane %v1859, 4
      %v1862 = vshll.u32 %v1541, 16
      %v1864 = vrot.slane %v1862, 5
      %v1865 = vsel %vm336, %v1860, %v1864
      %v1866 = vshrl.u32 %v1541, 16
      %v1868 = vrot.slane %v1866, 4
      %v1869 = vor.u32 %v1868, %v1864
      %v1870 = vrot.slane %v1869, 4
      %v1872 = vshll.u32 %v1560, 16
      %v1874 = vrot.slane %v1872, 5
      %v1875 = vsel %vm336, %v1870, %v1874
      %v1877 = vshrl.u32 %v1542, 16
      %v1879 = vrot.slane %v1877, 4
      %v1880 = vshll.u32 %v1542, 16
      %v1882 = vrot.slane %v1880, 5
      %v1883 = vor.u32 %v1879, %v1882
      %v1884 = vrot.slane %v1883, 4
      %v1886 = vshll.u32 %v1543, 16
      %v1888 = vrot.slane %v1886, 5
      %v1889 = vsel %vm336, %v1884, %v1888
      %v1890 = vshrl.u32 %v1543, 16
      %v1892 = vrot.slane %v1890, 4
      %v1893 = vor.u32 %v1892, %v1888
      %v1894 = vrot.slane %v1893, 4
      %v1896 = vshll.u32 %v1561, 16
      %v1898 = vrot.slane %v1896, 5
      %v1899 = vsel %vm336, %v1894, %v1898
      %v1901 = vshrl.u32 %v1544, 16
      %v1903 = vrot.slane %v1901, 4
      %v1904 = vshll.u32 %v1544, 16
      %v1906 = vrot.slane %v1904, 5
      %v1907 = vor.u32 %v1903, %v1906
      %v1908 = vrot.slane %v1907, 4
      %v1910 = vshll.u32 %v1545, 16
      %v1912 = vrot.slane %v1910, 5
      %v1913 = vsel %vm336, %v1908, %v1912
      %v1914 = vshrl.u32 %v1545, 16
      %v1916 = vrot.slane %v1914, 4
      %v1917 = vor.u32 %v1916, %v1912
      %v1918 = vrot.slane %v1917, 4
      %v1920 = vshll.u32 %v1562, 16
      %v1922 = vrot.slane %v1920, 5
      %v1923 = vsel %vm336, %v1918, %v1922
      %v1925 = vshrl.u32 %v1546, 16
      %v1927 = vrot.slane %v1925, 4
      %v1928 = vshll.u32 %v1546, 16
      %v1930 = vrot.slane %v1928, 5
      %v1931 = vor.u32 %v1927, %v1930
      %v1932 = vrot.slane %v1931, 4
      %v1934 = vshll.u32 %v1547, 16
      %v1936 = vrot.slane %v1934, 5
      %v1937 = vsel %vm336, %v1932, %v1936
      %v1938 = vshrl.u32 %v1547, 16
      %v1940 = vrot.slane %v1938, 4
      %v1941 = vor.u32 %v1940, %v1936
      %v1942 = vrot.slane %v1941, 4
      %v1944 = vshll.u32 %v1563, 16
      %v1946 = vrot.slane %v1944, 5
      %v1947 = vsel %vm336, %v1942, %v1946
      %v1948 = vld [vmem:[%s1515] sm:$0xe]
      %v1949 = vld [vmem:[%s1515 + $0xc] sm:$0xe]
      %v1950 = vld [vmem:[%s1515 + $0x18] sm:$0xe]
      %v1951 = vld [vmem:[%s1515 + $0x24] sm:$0xe]
      %v1952 = vld [vmem:[%s1515 + $0x30] sm:$0xe]
      %v1953 = vld [vmem:[%s1515 + $0x3c] sm:$0xe]
      %v1954 = vld [vmem:[%s1515 + $0x48] sm:$0xe]
      %v1955 = vld [vmem:[%s1515 + $0x54] sm:$0xe]
      %v1956 = vld [vmem:[%s1515 + $0x60] sm:$0xe]
      %v1957 = vld [vmem:[%s1515 + $0x6c] sm:$0xe]
      %v1958 = vld [vmem:[%s1515 + $0x78] sm:$0xe]
      %v1959 = vld [vmem:[%s1515 + $0x84] sm:$0xe]
      %v1960 = vld [vmem:[%s1515 + $0x90] sm:$0xe]
      %v1961 = vld [vmem:[%s1515 + $0x9c] sm:$0xe]
      %v1962 = vld [vmem:[%s1515 + $0xa8] sm:$0xe]
      %v1963 = vld [vmem:[%s1515 + $0xb4] sm:$0xe]
      %v2012 = vrot.slane %v1948, 5
      %v2013 = vrot.slane %v2012, 4
      %v2014 = vrot.slane %v1517, 5
      %v2015 = vsel %vm787, %v2013, %v2014
      %v2016 = vrot.slane %v2014, 4
      %v2017 = vrot.slane %v1548, 5
      %v2018 = vsel %vm787, %v2016, %v2017
      %v2019 = vrot.slane %v1949, 5
      %v2020 = vrot.slane %v2019, 4
      %v2021 = vrot.slane %v1519, 5
      %v2022 = vsel %vm787, %v2020, %v2021
      %v2023 = vrot.slane %v2021, 4
      %v2024 = vrot.slane %v1549, 5
      %v2025 = vsel %vm787, %v2023, %v2024
      %v2026 = vrot.slane %v1950, 5
      %v2027 = vrot.slane %v2026, 4
      %v2028 = vrot.slane %v1521, 5
      %v2029 = vsel %vm787, %v2027, %v2028
      %v2030 = vrot.slane %v2028, 4
      %v2031 = vrot.slane %v1550, 5
      %v2032 = vsel %vm787, %v2030, %v2031
      %v2033 = vrot.slane %v1951, 5
      %v2034 = vrot.slane %v2033, 4
      %v2035 = vrot.slane %v1523, 5
      %v2036 = vsel %vm787, %v2034, %v2035
      %v2037 = vrot.slane %v2035, 4
      %v2038 = vrot.slane %v1551, 5
      %v2039 = vsel %vm787, %v2037, %v2038
      %v2040 = vrot.slane %v1952, 5
      %v2041 = vrot.slane %v2040, 4
      %v2042 = vrot.slane %v1525, 5
      %v2043 = vsel %vm787, %v2041, %v2042
      %v2044 = vrot.slane %v2042, 4
      %v2045 = vrot.slane %v1552, 5
      %v2046 = vsel %vm787, %v2044, %v2045
      %v2047 = vrot.slane %v1953, 5
      %v2048 = vrot.slane %v2047, 4
      %v2049 = vrot.slane %v1527, 5
      %v2050 = vsel %vm787, %v2048, %v2049
      %v2051 = vrot.slane %v2049, 4
      %v2052 = vrot.slane %v1553, 5
      %v2053 = vsel %vm787, %v2051, %v2052
      %v2054 = vrot.slane %v1954, 5
      %v2055 = vrot.slane %v2054, 4
      %v2056 = vrot.slane %v1529, 5
      %v2057 = vsel %vm787, %v2055, %v2056
      %v2058 = vrot.slane %v2056, 4
      %v2059 = vrot.slane %v1554, 5
      %v2060 = vsel %vm787, %v2058, %v2059
      %v2061 = vrot.slane %v1955, 5
      %v2062 = vrot.slane %v2061, 4
      %v2063 = vrot.slane %v1531, 5
      %v2064 = vsel %vm787, %v2062, %v2063
      %v2065 = vrot.slane %v2063, 4
      %v2066 = vrot.slane %v1555, 5
      %v2067 = vsel %vm787, %v2065, %v2066
      %v2068 = vrot.slane %v1956, 5
      %v2069 = vrot.slane %v2068, 4
      %v2070 = vrot.slane %v1533, 5
      %v2071 = vsel %vm787, %v2069, %v2070
      %v2072 = vrot.slane %v2070, 4
      %v2073 = vrot.slane %v1556, 5
      %v2074 = vsel %vm787, %v2072, %v2073
      %v2075 = vrot.slane %v1957, 5
      %v2076 = vrot.slane %v2075, 4
      %v2077 = vrot.slane %v1535, 5
      %v2078 = vsel %vm787, %v2076, %v2077
      %v2079 = vrot.slane %v2077, 4
      %v2080 = vrot.slane %v1557, 5
      %v2081 = vsel %vm787, %v2079, %v2080
      %v2082 = vrot.slane %v1958, 5
      %v2083 = vrot.slane %v2082, 4
      %v2084 = vrot.slane %v1537, 5
      %v2085 = vsel %vm787, %v2083, %v2084
      %v2086 = vrot.slane %v2084, 4
      %v2087 = vrot.slane %v1558, 5
      %v2088 = vsel %vm787, %v2086, %v2087
      %v2089 = vrot.slane %v1959, 5
      %v2090 = vrot.slane %v2089, 4
      %v2091 = vrot.slane %v1539, 5
      %v2092 = vsel %vm787, %v2090, %v2091
      %v2093 = vrot.slane %v2091, 4
      %v2094 = vrot.slane %v1559, 5
      %v2095 = vsel %vm787, %v2093, %v2094
      %v2096 = vrot.slane %v1960, 5
      %v2097 = vrot.slane %v2096, 4
      %v2098 = vrot.slane %v1541, 5
      %v2099 = vsel %vm787, %v2097, %v2098
      %v2100 = vrot.slane %v2098, 4
      %v2101 = vrot.slane %v1560, 5
      %v2102 = vsel %vm787, %v2100, %v2101
      %v2103 = vrot.slane %v1961, 5
      %v2104 = vrot.slane %v2103, 4
      %v2105 = vrot.slane %v1543, 5
      %v2106 = vsel %vm787, %v2104, %v2105
      %v2107 = vrot.slane %v2105, 4
      %v2108 = vrot.slane %v1561, 5
      %v2109 = vsel %vm787, %v2107, %v2108
      %v2110 = vrot.slane %v1962, 5
      %v2111 = vrot.slane %v2110, 4
      %v2112 = vrot.slane %v1545, 5
      %v2113 = vsel %vm787, %v2111, %v2112
      %v2114 = vrot.slane %v2112, 4
      %v2115 = vrot.slane %v1562, 5
      %v2116 = vsel %vm787, %v2114, %v2115
      %v2117 = vrot.slane %v1963, 5
      %v2118 = vrot.slane %v2117, 4
      %v2119 = vrot.slane %v1547, 5
      %v2120 = vsel %vm787, %v2118, %v2119
      %v2121 = vrot.slane %v2119, 4
      %v2122 = vrot.slane %v1563, 5
      %v2123 = vsel %vm787, %v2121, %v2122
      %v2140 = vunpack.c.l.b16 %v286
      %v2141 = vunpack.c.l.b16 %v287
      %v2142 = vunpack.c.l.b16 %v288
      %v2143 = vunpack.c.l.b16 %v289
      %v2144 = vunpack.c.l.b16 %v290
      %v2145 = vunpack.c.l.b16 %v291
      %v2146 = vunpack.c.l.b16 %v292
      %v2147 = vunpack.c.l.b16 %v293
      %v2148 = vunpack.c.l.b16 %v294
      %v2149 = vunpack.c.l.b16 %v295
      %v2150 = vunpack.c.l.b16 %v296
      %v2151 = vunpack.c.l.b16 %v297
      %v2152 = vunpack.c.l.b16 %v298
      %v2153 = vunpack.c.l.b16 %v299
      %v2154 = vunpack.c.l.b16 %v300
      %v2155 = vunpack.c.l.b16 %v301
      %v2156 = vunpack.c.l.b16 %v302
      %v2157 = vunpack.c.l.b16 %v303
      %v2158 = vunpack.c.l.b16 %v304
      %v2159 = vunpack.c.l.b16 %v305
      %v2160 = vunpack.c.l.b16 %v306
      %v2161 = vunpack.c.l.b16 %v307
      %v2162 = vunpack.c.l.b16 %v308
      %v2163 = vunpack.c.l.b16 %v309
      %v2164 = vunpack.c.l.b16 %v310
      %v2165 = vunpack.c.l.b16 %v311
      %v2166 = vunpack.c.l.b16 %v312
      %v2167 = vunpack.c.l.b16 %v313
      %v2168 = vunpack.c.l.b16 %v314
      %v2169 = vunpack.c.l.b16 %v315
      %v2170 = vunpack.c.l.b16 %v316
      %v2171 = vunpack.c.l.b16 %v317
      %v2172 = vpack.c.b16 %v2141, %v2140
      %v2173 = vpack.c.b16 %v2143, %v2142
      %v2174 = vpack.c.b16 %v2145, %v2144
      %v2175 = vpack.c.b16 %v2147, %v2146
      %v2176 = vpack.c.b16 %v2149, %v2148
      %v2177 = vpack.c.b16 %v2151, %v2150
      %v2178 = vpack.c.b16 %v2153, %v2152
      %v2179 = vpack.c.b16 %v2155, %v2154
      %v2180 = vpack.c.b16 %v2157, %v2156
      %v2181 = vpack.c.b16 %v2159, %v2158
      %v2182 = vpack.c.b16 %v2161, %v2160
      %v2183 = vpack.c.b16 %v2163, %v2162
      %v2184 = vpack.c.b16 %v2165, %v2164
      %v2185 = vpack.c.b16 %v2167, %v2166
      %v2186 = vpack.c.b16 %v2169, %v2168
      %v2187 = vpack.c.b16 %v2171, %v2170
      %v2188 = vunpack.c.l.b16 %v350
      %v2189 = vunpack.c.l.b16 %v360
      %v2190 = vunpack.c.l.b16 %v374
      %v2191 = vunpack.c.l.b16 %v384
      %v2192 = vunpack.c.l.b16 %v398
      %v2193 = vunpack.c.l.b16 %v408
      %v2194 = vunpack.c.l.b16 %v422
      %v2195 = vunpack.c.l.b16 %v432
      %v2196 = vunpack.c.l.b16 %v446
      %v2197 = vunpack.c.l.b16 %v456
      %v2198 = vunpack.c.l.b16 %v470
      %v2199 = vunpack.c.l.b16 %v480
      %v2200 = vunpack.c.l.b16 %v494
      %v2201 = vunpack.c.l.b16 %v504
      %v2202 = vunpack.c.l.b16 %v518
      %v2203 = vunpack.c.l.b16 %v528
      %v2204 = vunpack.c.l.b16 %v542
      %v2205 = vunpack.c.l.b16 %v552
      %v2206 = vunpack.c.l.b16 %v566
      %v2207 = vunpack.c.l.b16 %v576
      %v2208 = vunpack.c.l.b16 %v590
      %v2209 = vunpack.c.l.b16 %v600
      %v2210 = vunpack.c.l.b16 %v614
      %v2211 = vunpack.c.l.b16 %v624
      %v2212 = vunpack.c.l.b16 %v638
      %v2213 = vunpack.c.l.b16 %v648
      %v2214 = vunpack.c.l.b16 %v662
      %v2215 = vunpack.c.l.b16 %v672
      %v2216 = vunpack.c.l.b16 %v686
      %v2217 = vunpack.c.l.b16 %v696
      %v2218 = vunpack.c.l.b16 %v710
      %v2219 = vunpack.c.l.b16 %v720
      %v2220 = vpack.c.b16 %v2189, %v2188
      %v2221 = vpack.c.b16 %v2191, %v2190
      %v2222 = vpack.c.b16 %v2193, %v2192
      %v2223 = vpack.c.b16 %v2195, %v2194
      %v2224 = vpack.c.b16 %v2197, %v2196
      %v2225 = vpack.c.b16 %v2199, %v2198
      %v2226 = vpack.c.b16 %v2201, %v2200
      %v2227 = vpack.c.b16 %v2203, %v2202
      %v2228 = vpack.c.b16 %v2205, %v2204
      %v2229 = vpack.c.b16 %v2207, %v2206
      %v2230 = vpack.c.b16 %v2209, %v2208
      %v2231 = vpack.c.b16 %v2211, %v2210
      %v2232 = vpack.c.b16 %v2213, %v2212
      %v2233 = vpack.c.b16 %v2215, %v2214
      %v2234 = vpack.c.b16 %v2217, %v2216
      %v2235 = vpack.c.b16 %v2219, %v2218
      %2236 = vrot.lane.b32.xlu0 %v2220, 4
      %v2237 = vpop.permute.xlu0 %2236
      %2238 = vrot.lane.b32.xlu0 %v2221, 4
      %v2239 = vpop.permute.xlu0 %2238
      %2240 = vrot.lane.b32.xlu0 %v2222, 4
      %v2241 = vpop.permute.xlu0 %2240
      %2242 = vrot.lane.b32.xlu0 %v2223, 4
      %v2243 = vpop.permute.xlu0 %2242
      %2244 = vrot.lane.b32.xlu0 %v2224, 4
      %v2245 = vpop.permute.xlu0 %2244
      %2246 = vrot.lane.b32.xlu0 %v2225, 4
      %v2247 = vpop.permute.xlu0 %2246
      %2248 = vrot.lane.b32.xlu0 %v2226, 4
      %v2249 = vpop.permute.xlu0 %2248
      %2250 = vrot.lane.b32.xlu0 %v2227, 4
      %v2251 = vpop.permute.xlu0 %2250
      %2252 = vrot.lane.b32.xlu0 %v2228, 4
      %v2253 = vpop.permute.xlu0 %2252
      %2254 = vrot.lane.b32.xlu0 %v2229, 4
      %v2255 = vpop.permute.xlu0 %2254
      %2256 = vrot.lane.b32.xlu0 %v2230, 4
      %v2257 = vpop.permute.xlu0 %2256
      %2258 = vrot.lane.b32.xlu0 %v2231, 4
      %v2259 = vpop.permute.xlu0 %2258
      %2260 = vrot.lane.b32.xlu0 %v2232, 4
      %v2261 = vpop.permute.xlu0 %2260
      %2262 = vrot.lane.b32.xlu0 %v2233, 4
      %v2263 = vpop.permute.xlu0 %2262
      %2264 = vrot.lane.b32.xlu0 %v2234, 4
      %v2265 = vpop.permute.xlu0 %2264
      %2266 = vrot.lane.b32.xlu0 %v2235, 4
      %v2267 = vpop.permute.xlu0 %2266
      %v2268 = vunpack.c.l.b16 %v791
      %v2269 = vunpack.c.l.b16 %v794
      %v2270 = vunpack.c.l.b16 %v798
      %v2271 = vunpack.c.l.b16 %v801
      %v2272 = vunpack.c.l.b16 %v805
      %v2273 = vunpack.c.l.b16 %v808
      %v2274 = vunpack.c.l.b16 %v812
      %v2275 = vunpack.c.l.b16 %v815
      %v2276 = vunpack.c.l.b16 %v819
      %v2277 = vunpack.c.l.b16 %v822
      %v2278 = vunpack.c.l.b16 %v826
      %v2279 = vunpack.c.l.b16 %v829
      %v2280 = vunpack.c.l.b16 %v833
      %v2281 = vunpack.c.l.b16 %v836
      %v2282 = vunpack.c.l.b16 %v840
      %v2283 = vunpack.c.l.b16 %v843
      %v2284 = vunpack.c.l.b16 %v847
      %v2285 = vunpack.c.l.b16 %v850
      %v2286 = vunpack.c.l.b16 %v854
      %v2287 = vunpack.c.l.b16 %v857
      %v2288 = vunpack.c.l.b16 %v861
      %v2289 = vunpack.c.l.b16 %v864
      %v2290 = vunpack.c.l.b16 %v868
      %v2291 = vunpack.c.l.b16 %v871
      %v2292 = vunpack.c.l.b16 %v875
      %v2293 = vunpack.c.l.b16 %v878
      %v2294 = vunpack.c.l.b16 %v882
      %v2295 = vunpack.c.l.b16 %v885
      %v2296 = vunpack.c.l.b16 %v889
      %v2297 = vunpack.c.l.b16 %v892
      %v2298 = vunpack.c.l.b16 %v896
      %v2299 = vunpack.c.l.b16 %v899
      %v2300 = vpack.c.b16 %v2269, %v2268
      %v2301 = vpack.c.b16 %v2271, %v2270
      %v2302 = vpack.c.b16 %v2273, %v2272
      %v2303 = vpack.c.b16 %v2275, %v2274
      %v2304 = vpack.c.b16 %v2277, %v2276
      %v2305 = vpack.c.b16 %v2279, %v2278
      %v2306 = vpack.c.b16 %v2281, %v2280
      %v2307 = vpack.c.b16 %v2283, %v2282
      %v2308 = vpack.c.b16 %v2285, %v2284
      %v2309 = vpack.c.b16 %v2287, %v2286
      %v2310 = vpack.c.b16 %v2289, %v2288
      %v2311 = vpack.c.b16 %v2291, %v2290
      %v2312 = vpack.c.b16 %v2293, %v2292
      %v2313 = vpack.c.b16 %v2295, %v2294
      %v2314 = vpack.c.b16 %v2297, %v2296
      %v2315 = vpack.c.b16 %v2299, %v2298
      %2316 = vrot.lane.b32.xlu0 %v2300, 8
      %v2317 = vpop.permute.xlu0 %2316
      %2318 = vrot.lane.b32.xlu0 %v2301, 8
      %v2319 = vpop.permute.xlu0 %2318
      %2320 = vrot.lane.b32.xlu0 %v2302, 8
      %v2321 = vpop.permute.xlu0 %2320
      %2322 = vrot.lane.b32.xlu0 %v2303, 8
      %v2323 = vpop.permute.xlu0 %2322
      %2324 = vrot.lane.b32.xlu0 %v2304, 8
      %v2325 = vpop.permute.xlu0 %2324
      %2326 = vrot.lane.b32.xlu0 %v2305, 8
      %v2327 = vpop.permute.xlu0 %2326
      %2328 = vrot.lane.b32.xlu0 %v2306, 8
      %v2329 = vpop.permute.xlu0 %2328
      %2330 = vrot.lane.b32.xlu0 %v2307, 8
      %v2331 = vpop.permute.xlu0 %2330
      %2332 = vrot.lane.b32.xlu0 %v2308, 8
      %v2333 = vpop.permute.xlu0 %2332
      %2334 = vrot.lane.b32.xlu0 %v2309, 8
      %v2335 = vpop.permute.xlu0 %2334
      %2336 = vrot.lane.b32.xlu0 %v2310, 8
      %v2337 = vpop.permute.xlu0 %2336
      %2338 = vrot.lane.b32.xlu0 %v2311, 8
      %v2339 = vpop.permute.xlu0 %2338
      %2340 = vrot.lane.b32.xlu0 %v2312, 8
      %v2341 = vpop.permute.xlu0 %2340
      %2342 = vrot.lane.b32.xlu0 %v2313, 8
      %v2343 = vpop.permute.xlu0 %2342
      %2344 = vrot.lane.b32.xlu0 %v2314, 8
      %v2345 = vpop.permute.xlu0 %2344
      %2346 = vrot.lane.b32.xlu0 %v2315, 8
      %v2347 = vpop.permute.xlu0 %2346
      %v2364 = vunpack.c.l.b16 %v904
      %v2365 = vunpack.c.l.b16 %v905
      %v2366 = vunpack.c.l.b16 %v906
      %v2367 = vunpack.c.l.b16 %v907
      %v2368 = vunpack.c.l.b16 %v908
      %v2369 = vunpack.c.l.b16 %v909
      %v2370 = vunpack.c.l.b16 %v910
      %v2371 = vunpack.c.l.b16 %v911
      %v2372 = vunpack.c.l.b16 %v912
      %v2373 = vunpack.c.l.b16 %v913
      %v2374 = vunpack.c.l.b16 %v914
      %v2375 = vunpack.c.l.b16 %v915
      %v2376 = vunpack.c.l.b16 %v916
      %v2377 = vunpack.c.l.b16 %v917
      %v2378 = vunpack.c.l.b16 %v918
      %v2379 = vunpack.c.l.b16 %v919
      %v2380 = vunpack.c.l.b16 %v920
      %v2381 = vunpack.c.l.b16 %v921
      %v2382 = vunpack.c.l.b16 %v922
      %v2383 = vunpack.c.l.b16 %v923
      %v2384 = vunpack.c.l.b16 %v924
      %v2385 = vunpack.c.l.b16 %v925
      %v2386 = vunpack.c.l.b16 %v926
      %v2387 = vunpack.c.l.b16 %v927
      %v2388 = vunpack.c.l.b16 %v928
      %v2389 = vunpack.c.l.b16 %v929
      %v2390 = vunpack.c.l.b16 %v930
      %v2391 = vunpack.c.l.b16 %v931
      %v2392 = vunpack.c.l.b16 %v932
      %v2393 = vunpack.c.l.b16 %v933
      %v2394 = vunpack.c.l.b16 %v934
      %v2395 = vunpack.c.l.b16 %v935
      %v2396 = vpack.c.b16 %v2365, %v2364
      %v2397 = vpack.c.b16 %v2367, %v2366
      %v2398 = vpack.c.b16 %v2369, %v2368
      %v2399 = vpack.c.b16 %v2371, %v2370
      %v2400 = vpack.c.b16 %v2373, %v2372
      %v2401 = vpack.c.b16 %v2375, %v2374
      %v2402 = vpack.c.b16 %v2377, %v2376
      %v2403 = vpack.c.b16 %v2379, %v2378
      %v2404 = vpack.c.b16 %v2381, %v2380
      %v2405 = vpack.c.b16 %v2383, %v2382
      %v2406 = vpack.c.b16 %v2385, %v2384
      %v2407 = vpack.c.b16 %v2387, %v2386
      %v2408 = vpack.c.b16 %v2389, %v2388
      %v2409 = vpack.c.b16 %v2391, %v2390
      %v2410 = vpack.c.b16 %v2393, %v2392
      %v2411 = vpack.c.b16 %v2395, %v2394
      %2412 = vrot.lane.b32.xlu0 %v2396, 12
      %v2413 = vpop.permute.xlu0 %2412
      %2414 = vrot.lane.b32.xlu0 %v2397, 12
      %v2415 = vpop.permute.xlu0 %2414
      %2416 = vrot.lane.b32.xlu0 %v2398, 12
      %v2417 = vpop.permute.xlu0 %2416
      %2418 = vrot.lane.b32.xlu0 %v2399, 12
      %v2419 = vpop.permute.xlu0 %2418
      %2420 = vrot.lane.b32.xlu0 %v2400, 12
      %v2421 = vpop.permute.xlu0 %2420
      %2422 = vrot.lane.b32.xlu0 %v2401, 12
      %v2423 = vpop.permute.xlu0 %2422
      %2424 = vrot.lane.b32.xlu0 %v2402, 12
      %v2425 = vpop.permute.xlu0 %2424
      %2426 = vrot.lane.b32.xlu0 %v2403, 12
      %v2427 = vpop.permute.xlu0 %2426
      %2428 = vrot.lane.b32.xlu0 %v2404, 12
      %v2429 = vpop.permute.xlu0 %2428
      %2430 = vrot.lane.b32.xlu0 %v2405, 12
      %v2431 = vpop.permute.xlu0 %2430
      %2432 = vrot.lane.b32.xlu0 %v2406, 12
      %v2433 = vpop.permute.xlu0 %2432
      %2434 = vrot.lane.b32.xlu0 %v2407, 12
      %v2435 = vpop.permute.xlu0 %2434
      %2436 = vrot.lane.b32.xlu0 %v2408, 12
      %v2437 = vpop.permute.xlu0 %2436
      %2438 = vrot.lane.b32.xlu0 %v2409, 12
      %v2439 = vpop.permute.xlu0 %2438
      %2440 = vrot.lane.b32.xlu0 %v2410, 12
      %v2441 = vpop.permute.xlu0 %2440
      %2442 = vrot.lane.b32.xlu0 %v2411, 12
      %v2443 = vpop.permute.xlu0 %2442
      %v2444 = vunpack.c.l.b16 %v965
      %v2445 = vunpack.c.l.b16 %v975
      %v2446 = vunpack.c.l.b16 %v989
      %v2447 = vunpack.c.l.b16 %v999
      %v2448 = vunpack.c.l.b16 %v1013
      %v2449 = vunpack.c.l.b16 %v1023
      %v2450 = vunpack.c.l.b16 %v1037
      %v2451 = vunpack.c.l.b16 %v1047
      %v2452 = vunpack.c.l.b16 %v1061
      %v2453 = vunpack.c.l.b16 %v1071
      %v2454 = vunpack.c.l.b16 %v1085
      %v2455 = vunpack.c.l.b16 %v1095
      %v2456 = vunpack.c.l.b16 %v1109
      %v2457 = vunpack.c.l.b16 %v1119
      %v2458 = vunpack.c.l.b16 %v1133
      %v2459 = vunpack.c.l.b16 %v1143
      %v2460 = vunpack.c.l.b16 %v1157
      %v2461 = vunpack.c.l.b16 %v1167
      %v2462 = vunpack.c.l.b16 %v1181
      %v2463 = vunpack.c.l.b16 %v1191
      %v2464 = vunpack.c.l.b16 %v1205
      %v2465 = vunpack.c.l.b16 %v1215
      %v2466 = vunpack.c.l.b16 %v1229
      %v2467 = vunpack.c.l.b16 %v1239
      %v2468 = vunpack.c.l.b16 %v1253
      %v2469 = vunpack.c.l.b16 %v1263
      %v2470 = vunpack.c.l.b16 %v1277
      %v2471 = vunpack.c.l.b16 %v1287
      %v2472 = vunpack.c.l.b16 %v1301
      %v2473 = vunpack.c.l.b16 %v1311
      %v2474 = vunpack.c.l.b16 %v1325
      %v2475 = vunpack.c.l.b16 %v1335
      %v2476 = vpack.c.b16 %v2445, %v2444
      %v2477 = vpack.c.b16 %v2447, %v2446
      %v2478 = vpack.c.b16 %v2449, %v2448
      %v2479 = vpack.c.b16 %v2451, %v2450
      %v2480 = vpack.c.b16 %v2453, %v2452
      %v2481 = vpack.c.b16 %v2455, %v2454
      %v2482 = vpack.c.b16 %v2457, %v2456
      %v2483 = vpack.c.b16 %v2459, %v2458
      %v2484 = vpack.c.b16 %v2461, %v2460
      %v2485 = vpack.c.b16 %v2463, %v2462
      %v2486 = vpack.c.b16 %v2465, %v2464
      %v2487 = vpack.c.b16 %v2467, %v2466
      %v2488 = vpack.c.b16 %v2469, %v2468
      %v2489 = vpack.c.b16 %v2471, %v2470
      %v2490 = vpack.c.b16 %v2473, %v2472
      %v2491 = vpack.c.b16 %v2475, %v2474
      %2492 = vrot.lane.b32.xlu0 %v2476, 16
      %v2493 = vpop.permute.xlu0 %2492
      %2494 = vrot.lane.b32.xlu0 %v2477, 16
      %v2495 = vpop.permute.xlu0 %2494
      %2496 = vrot.lane.b32.xlu0 %v2478, 16
      %v2497 = vpop.permute.xlu0 %2496
      %2498 = vrot.lane.b32.xlu0 %v2479, 16
      %v2499 = vpop.permute.xlu0 %2498
      %2500 = vrot.lane.b32.xlu0 %v2480, 16
      %v2501 = vpop.permute.xlu0 %2500
      %2502 = vrot.lane.b32.xlu0 %v2481, 16
      %v2503 = vpop.permute.xlu0 %2502
      %2504 = vrot.lane.b32.xlu0 %v2482, 16
      %v2505 = vpop.permute.xlu0 %2504
      %2506 = vrot.lane.b32.xlu0 %v2483, 16
      %v2507 = vpop.permute.xlu0 %2506
      %2508 = vrot.lane.b32.xlu0 %v2484, 16
      %v2509 = vpop.permute.xlu0 %2508
      %2510 = vrot.lane.b32.xlu0 %v2485, 16
      %v2511 = vpop.permute.xlu0 %2510
      %2512 = vrot.lane.b32.xlu0 %v2486, 16
      %v2513 = vpop.permute.xlu0 %2512
      %2514 = vrot.lane.b32.xlu0 %v2487, 16
      %v2515 = vpop.permute.xlu0 %2514
      %2516 = vrot.lane.b32.xlu0 %v2488, 16
      %v2517 = vpop.permute.xlu0 %2516
      %2518 = vrot.lane.b32.xlu0 %v2489, 16
      %v2519 = vpop.permute.xlu0 %2518
      %2520 = vrot.lane.b32.xlu0 %v2490, 16
      %v2521 = vpop.permute.xlu0 %2520
      %2522 = vrot.lane.b32.xlu0 %v2491, 16
      %v2523 = vpop.permute.xlu0 %2522
      %v2524 = vunpack.c.l.b16 %v1403
      %v2525 = vunpack.c.l.b16 %v1406
      %v2526 = vunpack.c.l.b16 %v1410
      %v2527 = vunpack.c.l.b16 %v1413
      %v2528 = vunpack.c.l.b16 %v1417
      %v2529 = vunpack.c.l.b16 %v1420
      %v2530 = vunpack.c.l.b16 %v1424
      %v2531 = vunpack.c.l.b16 %v1427
      %v2532 = vunpack.c.l.b16 %v1431
      %v2533 = vunpack.c.l.b16 %v1434
      %v2534 = vunpack.c.l.b16 %v1438
      %v2535 = vunpack.c.l.b16 %v1441
      %v2536 = vunpack.c.l.b16 %v1445
      %v2537 = vunpack.c.l.b16 %v1448
      %v2538 = vunpack.c.l.b16 %v1452
      %v2539 = vunpack.c.l.b16 %v1455
      %v2540 = vunpack.c.l.b16 %v1459
      %v2541 = vunpack.c.l.b16 %v1462
      %v2542 = vunpack.c.l.b16 %v1466
      %v2543 = vunpack.c.l.b16 %v1469
      %v2544 = vunpack.c.l.b16 %v1473
      %v2545 = vunpack.c.l.b16 %v1476
      %v2546 = vunpack.c.l.b16 %v1480
      %v2547 = vunpack.c.l.b16 %v1483
      %v2548 = vunpack.c.l.b16 %v1487
      %v2549 = vunpack.c.l.b16 %v1490
      %v2550 = vunpack.c.l.b16 %v1494
      %v2551 = vunpack.c.l.b16 %v1497
      %v2552 = vunpack.c.l.b16 %v1501
      %v2553 = vunpack.c.l.b16 %v1504
      %v2554 = vunpack.c.l.b16 %v1508
      %v2555 = vunpack.c.l.b16 %v1511
      %v2556 = vpack.c.b16 %v2525, %v2524
      %v2557 = vpack.c.b16 %v2527, %v2526
      %v2558 = vpack.c.b16 %v2529, %v2528
      %v2559 = vpack.c.b16 %v2531, %v2530
      %v2560 = vpack.c.b16 %v2533, %v2532
      %v2561 = vpack.c.b16 %v2535, %v2534
      %v2562 = vpack.c.b16 %v2537, %v2536
      %v2563 = vpack.c.b16 %v2539, %v2538
      %v2564 = vpack.c.b16 %v2541, %v2540
      %v2565 = vpack.c.b16 %v2543, %v2542
      %v2566 = vpack.c.b16 %v2545, %v2544
      %v2567 = vpack.c.b16 %v2547, %v2546
      %v2568 = vpack.c.b16 %v2549, %v2548
      %v2569 = vpack.c.b16 %v2551, %v2550
      %v2570 = vpack.c.b16 %v2553, %v2552
      %v2571 = vpack.c.b16 %v2555, %v2554
      %2572 = vrot.lane.b32.xlu0 %v2556, 20
      %v2573 = vpop.permute.xlu0 %2572
      %2574 = vrot.lane.b32.xlu0 %v2557, 20
      %v2575 = vpop.permute.xlu0 %2574
      %2576 = vrot.lane.b32.xlu0 %v2558, 20
      %v2577 = vpop.permute.xlu0 %2576
      %2578 = vrot.lane.b32.xlu0 %v2559, 20
      %v2579 = vpop.permute.xlu0 %2578
      %2580 = vrot.lane.b32.xlu0 %v2560, 20
      %v2581 = vpop.permute.xlu0 %2580
      %2582 = vrot.lane.b32.xlu0 %v2561, 20
      %v2583 = vpop.permute.xlu0 %2582
      %2584 = vrot.lane.b32.xlu0 %v2562, 20
      %v2585 = vpop.permute.xlu0 %2584
      %2586 = vrot.lane.b32.xlu0 %v2563, 20
      %v2587 = vpop.permute.xlu0 %2586
      %2588 = vrot.lane.b32.xlu0 %v2564, 20
      %v2589 = vpop.permute.xlu0 %2588
      %2590 = vrot.lane.b32.xlu0 %v2565, 20
      %v2591 = vpop.permute.xlu0 %2590
      %2592 = vrot.lane.b32.xlu0 %v2566, 20
      %v2593 = vpop.permute.xlu0 %2592
      %2594 = vrot.lane.b32.xlu0 %v2567, 20
      %v2595 = vpop.permute.xlu0 %2594
      %2596 = vrot.lane.b32.xlu0 %v2568, 20
      %v2597 = vpop.permute.xlu0 %2596
      %2598 = vrot.lane.b32.xlu0 %v2569, 20
      %v2599 = vpop.permute.xlu0 %2598
      %2600 = vrot.lane.b32.xlu0 %v2570, 20
      %v2601 = vpop.permute.xlu0 %2600
      %2602 = vrot.lane.b32.xlu0 %v2571, 20
      %v2603 = vpop.permute.xlu0 %2602
      %v2620 = vunpack.c.l.b16 %v1516
      %v2621 = vunpack.c.l.b16 %v1517
      %v2622 = vunpack.c.l.b16 %v1518
      %v2623 = vunpack.c.l.b16 %v1519
      %v2624 = vunpack.c.l.b16 %v1520
      %v2625 = vunpack.c.l.b16 %v1521
      %v2626 = vunpack.c.l.b16 %v1522
      %v2627 = vunpack.c.l.b16 %v1523
      %v2628 = vunpack.c.l.b16 %v1524
      %v2629 = vunpack.c.l.b16 %v1525
      %v2630 = vunpack.c.l.b16 %v1526
      %v2631 = vunpack.c.l.b16 %v1527
      %v2632 = vunpack.c.l.b16 %v1528
      %v2633 = vunpack.c.l.b16 %v1529
      %v2634 = vunpack.c.l.b16 %v1530
      %v2635 = vunpack.c.l.b16 %v1531
      %v2636 = vunpack.c.l.b16 %v1532
      %v2637 = vunpack.c.l.b16 %v1533
      %v2638 = vunpack.c.l.b16 %v1534
      %v2639 = vunpack.c.l.b16 %v1535
      %v2640 = vunpack.c.l.b16 %v1536
      %v2641 = vunpack.c.l.b16 %v1537
      %v2642 = vunpack.c.l.b16 %v1538
      %v2643 = vunpack.c.l.b16 %v1539
      %v2644 = vunpack.c.l.b16 %v1540
      %v2645 = vunpack.c.l.b16 %v1541
      %v2646 = vunpack.c.l.b16 %v1542
      %v2647 = vunpack.c.l.b16 %v1543
      %v2648 = vunpack.c.l.b16 %v1544
      %v2649 = vunpack.c.l.b16 %v1545
      %v2650 = vunpack.c.l.b16 %v1546
      %v2651 = vunpack.c.l.b16 %v1547
      %v2652 = vpack.c.b16 %v2621, %v2620
      %v2653 = vpack.c.b16 %v2623, %v2622
      %v2654 = vpack.c.b16 %v2625, %v2624
      %v2655 = vpack.c.b16 %v2627, %v2626
      %v2656 = vpack.c.b16 %v2629, %v2628
      %v2657 = vpack.c.b16 %v2631, %v2630
      %v2658 = vpack.c.b16 %v2633, %v2632
      %v2659 = vpack.c.b16 %v2635, %v2634
      %v2660 = vpack.c.b16 %v2637, %v2636
      %v2661 = vpack.c.b16 %v2639, %v2638
      %v2662 = vpack.c.b16 %v2641, %v2640
      %v2663 = vpack.c.b16 %v2643, %v2642
      %v2664 = vpack.c.b16 %v2645, %v2644
      %v2665 = vpack.c.b16 %v2647, %v2646
      %v2666 = vpack.c.b16 %v2649, %v2648
      %v2667 = vpack.c.b16 %v2651, %v2650
      %2668 = vrot.lane.b32.xlu0 %v2652, 24
      %v2669 = vpop.permute.xlu0 %2668
      %2670 = vrot.lane.b32.xlu0 %v2653, 24
      %v2671 = vpop.permute.xlu0 %2670
      %2672 = vrot.lane.b32.xlu0 %v2654, 24
      %v2673 = vpop.permute.xlu0 %2672
      %2674 = vrot.lane.b32.xlu0 %v2655, 24
      %v2675 = vpop.permute.xlu0 %2674
      %2676 = vrot.lane.b32.xlu0 %v2656, 24
      %v2677 = vpop.permute.xlu0 %2676
      %2678 = vrot.lane.b32.xlu0 %v2657, 24
      %v2679 = vpop.permute.xlu0 %2678
      %2680 = vrot.lane.b32.xlu0 %v2658, 24
      %v2681 = vpop.permute.xlu0 %2680
      %2682 = vrot.lane.b32.xlu0 %v2659, 24
      %v2683 = vpop.permute.xlu0 %2682
      %2684 = vrot.lane.b32.xlu0 %v2660, 24
      %v2685 = vpop.permute.xlu0 %2684
      %2686 = vrot.lane.b32.xlu0 %v2661, 24
      %v2687 = vpop.permute.xlu0 %2686
      %2688 = vrot.lane.b32.xlu0 %v2662, 24
      %v2689 = vpop.permute.xlu0 %2688
      %2690 = vrot.lane.b32.xlu0 %v2663, 24
      %v2691 = vpop.permute.xlu0 %2690
      %2692 = vrot.lane.b32.xlu0 %v2664, 24
      %v2693 = vpop.permute.xlu0 %2692
      %2694 = vrot.lane.b32.xlu0 %v2665, 24
      %v2695 = vpop.permute.xlu0 %2694
      %2696 = vrot.lane.b32.xlu0 %v2666, 24
      %v2697 = vpop.permute.xlu0 %2696
      %2698 = vrot.lane.b32.xlu0 %v2667, 24
      %v2699 = vpop.permute.xlu0 %2698
      %v2700 = vunpack.c.l.b16 %v1577
      %v2701 = vunpack.c.l.b16 %v1587
      %v2702 = vunpack.c.l.b16 %v1601
      %v2703 = vunpack.c.l.b16 %v1611
      %v2704 = vunpack.c.l.b16 %v1625
      %v2705 = vunpack.c.l.b16 %v1635
      %v2706 = vunpack.c.l.b16 %v1649
      %v2707 = vunpack.c.l.b16 %v1659
      %v2708 = vunpack.c.l.b16 %v1673
      %v2709 = vunpack.c.l.b16 %v1683
      %v2710 = vunpack.c.l.b16 %v1697
      %v2711 = vunpack.c.l.b16 %v1707
      %v2712 = vunpack.c.l.b16 %v1721
      %v2713 = vunpack.c.l.b16 %v1731
      %v2714 = vunpack.c.l.b16 %v1745
      %v2715 = vunpack.c.l.b16 %v1755
      %v2716 = vunpack.c.l.b16 %v1769
      %v2717 = vunpack.c.l.b16 %v1779
      %v2718 = vunpack.c.l.b16 %v1793
      %v2719 = vunpack.c.l.b16 %v1803
      %v2720 = vunpack.c.l.b16 %v1817
      %v2721 = vunpack.c.l.b16 %v1827
      %v2722 = vunpack.c.l.b16 %v1841
      %v2723 = vunpack.c.l.b16 %v1851
      %v2724 = vunpack.c.l.b16 %v1865
      %v2725 = vunpack.c.l.b16 %v1875
      %v2726 = vunpack.c.l.b16 %v1889
      %v2727 = vunpack.c.l.b16 %v1899
      %v2728 = vunpack.c.l.b16 %v1913
      %v2729 = vunpack.c.l.b16 %v1923
      %v2730 = vunpack.c.l.b16 %v1937
      %v2731 = vunpack.c.l.b16 %v1947
      %v2732 = vpack.c.b16 %v2701, %v2700
      %v2733 = vpack.c.b16 %v2703, %v2702
      %v2734 = vpack.c.b16 %v2705, %v2704
      %v2735 = vpack.c.b16 %v2707, %v2706
      %v2736 = vpack.c.b16 %v2709, %v2708
      %v2737 = vpack.c.b16 %v2711, %v2710
      %v2738 = vpack.c.b16 %v2713, %v2712
      %v2739 = vpack.c.b16 %v2715, %v2714
      %v2740 = vpack.c.b16 %v2717, %v2716
      %v2741 = vpack.c.b16 %v2719, %v2718
      %v2742 = vpack.c.b16 %v2721, %v2720
      %v2743 = vpack.c.b16 %v2723, %v2722
      %v2744 = vpack.c.b16 %v2725, %v2724
      %v2745 = vpack.c.b16 %v2727, %v2726
      %v2746 = vpack.c.b16 %v2729, %v2728
      %v2747 = vpack.c.b16 %v2731, %v2730
      %2748 = vrot.lane.b32.xlu0 %v2732, 28
      %v2749 = vpop.permute.xlu0 %2748
      %2750 = vrot.lane.b32.xlu0 %v2733, 28
      %v2751 = vpop.permute.xlu0 %2750
      %2752 = vrot.lane.b32.xlu0 %v2734, 28
      %v2753 = vpop.permute.xlu0 %2752
      %2754 = vrot.lane.b32.xlu0 %v2735, 28
      %v2755 = vpop.permute.xlu0 %2754
      %2756 = vrot.lane.b32.xlu0 %v2736, 28
      %v2757 = vpop.permute.xlu0 %2756
      %2758 = vrot.lane.b32.xlu0 %v2737, 28
      %v2759 = vpop.permute.xlu0 %2758
      %2760 = vrot.lane.b32.xlu0 %v2738, 28
      %v2761 = vpop.permute.xlu0 %2760
      %2762 = vrot.lane.b32.xlu0 %v2739, 28
      %v2763 = vpop.permute.xlu0 %2762
      %2764 = vrot.lane.b32.xlu0 %v2740, 28
      %v2765 = vpop.permute.xlu0 %2764
      %2766 = vrot.lane.b32.xlu0 %v2741, 28
      %v2767 = vpop.permute.xlu0 %2766
      %2768 = vrot.lane.b32.xlu0 %v2742, 28
      %v2769 = vpop.permute.xlu0 %2768
      %2770 = vrot.lane.b32.xlu0 %v2743, 28
      %v2771 = vpop.permute.xlu0 %2770
      %2772 = vrot.lane.b32.xlu0 %v2744, 28
      %v2773 = vpop.permute.xlu0 %2772
      %2774 = vrot.lane.b32.xlu0 %v2745, 28
      %v2775 = vpop.permute.xlu0 %2774
      %2776 = vrot.lane.b32.xlu0 %v2746, 28
      %v2777 = vpop.permute.xlu0 %2776
      %2778 = vrot.lane.b32.xlu0 %v2747, 28
      %v2779 = vpop.permute.xlu0 %2778
      %v2780 = vunpack.c.l.b16 %v2015
      %v2781 = vunpack.c.l.b16 %v2018
      %v2782 = vunpack.c.l.b16 %v2022
      %v2783 = vunpack.c.l.b16 %v2025
      %v2784 = vunpack.c.l.b16 %v2029
      %v2785 = vunpack.c.l.b16 %v2032
      %v2786 = vunpack.c.l.b16 %v2036
      %v2787 = vunpack.c.l.b16 %v2039
      %v2788 = vunpack.c.l.b16 %v2043
      %v2789 = vunpack.c.l.b16 %v2046
      %v2790 = vunpack.c.l.b16 %v2050
      %v2791 = vunpack.c.l.b16 %v2053
      %v2792 = vunpack.c.l.b16 %v2057
      %v2793 = vunpack.c.l.b16 %v2060
      %v2794 = vunpack.c.l.b16 %v2064
      %v2795 = vunpack.c.l.b16 %v2067
      %v2796 = vunpack.c.l.b16 %v2071
      %v2797 = vunpack.c.l.b16 %v2074
      %v2798 = vunpack.c.l.b16 %v2078
      %v2799 = vunpack.c.l.b16 %v2081
      %v2800 = vunpack.c.l.b16 %v2085
      %v2801 = vunpack.c.l.b16 %v2088
      %v2802 = vunpack.c.l.b16 %v2092
      %v2803 = vunpack.c.l.b16 %v2095
      %v2804 = vunpack.c.l.b16 %v2099
      %v2805 = vunpack.c.l.b16 %v2102
      %v2806 = vunpack.c.l.b16 %v2106
      %v2807 = vunpack.c.l.b16 %v2109
      %v2808 = vunpack.c.l.b16 %v2113
      %v2809 = vunpack.c.l.b16 %v2116
      %v2810 = vunpack.c.l.b16 %v2120
      %v2811 = vunpack.c.l.b16 %v2123
      %v2812 = vpack.c.b16 %v2781, %v2780
      %v2813 = vpack.c.b16 %v2783, %v2782
      %v2814 = vpack.c.b16 %v2785, %v2784
      %v2815 = vpack.c.b16 %v2787, %v2786
      %v2816 = vpack.c.b16 %v2789, %v2788
      %v2817 = vpack.c.b16 %v2791, %v2790
      %v2818 = vpack.c.b16 %v2793, %v2792
      %v2819 = vpack.c.b16 %v2795, %v2794
      %v2820 = vpack.c.b16 %v2797, %v2796
      %v2821 = vpack.c.b16 %v2799, %v2798
      %v2822 = vpack.c.b16 %v2801, %v2800
      %v2823 = vpack.c.b16 %v2803, %v2802
      %v2824 = vpack.c.b16 %v2805, %v2804
      %v2825 = vpack.c.b16 %v2807, %v2806
      %v2826 = vpack.c.b16 %v2809, %v2808
      %v2827 = vpack.c.b16 %v2811, %v2810
      %2828 = vrot.lane.b32.xlu0 %v2812, 32
      %v2829 = vpop.permute.xlu0 %2828
      %2830 = vrot.lane.b32.xlu0 %v2813, 32
      %v2831 = vpop.permute.xlu0 %2830
      %2832 = vrot.lane.b32.xlu0 %v2814, 32
      %v2833 = vpop.permute.xlu0 %2832
      %2834 = vrot.lane.b32.xlu0 %v2815, 32
      %v2835 = vpop.permute.xlu0 %2834
      %2836 = vrot.lane.b32.xlu0 %v2816, 32
      %v2837 = vpop.permute.xlu0 %2836
      %2838 = vrot.lane.b32.xlu0 %v2817, 32
      %v2839 = vpop.permute.xlu0 %2838
      %2840 = vrot.lane.b32.xlu0 %v2818, 32
      %v2841 = vpop.permute.xlu0 %2840
      %2842 = vrot.lane.b32.xlu0 %v2819, 32
      %v2843 = vpop.permute.xlu0 %2842
      %2844 = vrot.lane.b32.xlu0 %v2820, 32
      %v2845 = vpop.permute.xlu0 %2844
      %2846 = vrot.lane.b32.xlu0 %v2821, 32
      %v2847 = vpop.permute.xlu0 %2846
      %2848 = vrot.lane.b32.xlu0 %v2822, 32
      %v2849 = vpop.permute.xlu0 %2848
      %2850 = vrot.lane.b32.xlu0 %v2823, 32
      %v2851 = vpop.permute.xlu0 %2850
      %2852 = vrot.lane.b32.xlu0 %v2824, 32
      %v2853 = vpop.permute.xlu0 %2852
      %2854 = vrot.lane.b32.xlu0 %v2825, 32
      %v2855 = vpop.permute.xlu0 %2854
      %2856 = vrot.lane.b32.xlu0 %v2826, 32
      %v2857 = vpop.permute.xlu0 %2856
      %2858 = vrot.lane.b32.xlu0 %v2827, 32
      %v2859 = vpop.permute.xlu0 %2858
      %vm2860 = vcmask 31744
      %v2863 = vsel %vm2860, %v2172, %v2237
      %v2866 = vsel %vm2860, %v2173, %v2239
      %v2869 = vsel %vm2860, %v2174, %v2241
      %v2872 = vsel %vm2860, %v2175, %v2243
      %v2875 = vsel %vm2860, %v2176, %v2245
      %v2878 = vsel %vm2860, %v2177, %v2247
      %v2881 = vsel %vm2860, %v2178, %v2249
      %v2884 = vsel %vm2860, %v2179, %v2251
      %v2887 = vsel %vm2860, %v2180, %v2253
      %v2890 = vsel %vm2860, %v2181, %v2255
      %v2893 = vsel %vm2860, %v2182, %v2257
      %v2896 = vsel %vm2860, %v2183, %v2259
      %v2899 = vsel %vm2860, %v2184, %v2261
      %v2902 = vsel %vm2860, %v2185, %v2263
      %v2905 = vsel %vm2860, %v2186, %v2265
      %v2908 = vsel %vm2860, %v2187, %v2267
      %vm2909 = vcmask 64512
      %v2911 = vsel %vm2909, %v2863, %v2317
      %v2913 = vsel %vm2909, %v2866, %v2319
      %v2915 = vsel %vm2909, %v2869, %v2321
      %v2917 = vsel %vm2909, %v2872, %v2323
      %v2919 = vsel %vm2909, %v2875, %v2325
      %v2921 = vsel %vm2909, %v2878, %v2327
      %v2923 = vsel %vm2909, %v2881, %v2329
      %v2925 = vsel %vm2909, %v2884, %v2331
      %v2927 = vsel %vm2909, %v2887, %v2333
      %v2929 = vsel %vm2909, %v2890, %v2335
      %v2931 = vsel %vm2909, %v2893, %v2337
      %v2933 = vsel %vm2909, %v2896, %v2339
      %v2935 = vsel %vm2909, %v2899, %v2341
      %v2937 = vsel %vm2909, %v2902, %v2343
      %v2939 = vsel %vm2909, %v2905, %v2345
      %v2941 = vsel %vm2909, %v2908, %v2347
      %vm2942 = vcmask 97280
      %v2944 = vsel %vm2942, %v2911, %v2413
      %v2946 = vsel %vm2942, %v2913, %v2415
      %v2948 = vsel %vm2942, %v2915, %v2417
      %v2950 = vsel %vm2942, %v2917, %v2419
      %v2952 = vsel %vm2942, %v2919, %v2421
      %v2954 = vsel %vm2942, %v2921, %v2423
      %v2956 = vsel %vm2942, %v2923, %v2425
      %v2958 = vsel %vm2942, %v2925, %v2427
      %v2960 = vsel %vm2942, %v2927, %v2429
      %v2962 = vsel %vm2942, %v2929, %v2431
      %v2964 = vsel %vm2942, %v2931, %v2433
      %v2966 = vsel %vm2942, %v2933, %v2435
      %v2968 = vsel %vm2942, %v2935, %v2437
      %v2970 = vsel %vm2942, %v2937, %v2439
      %v2972 = vsel %vm2942, %v2939, %v2441
      %v2974 = vsel %vm2942, %v2941, %v2443
      %vm2975 = vcmask 130048
      %v2977 = vsel %vm2975, %v2944, %v2493
      %v2979 = vsel %vm2975, %v2946, %v2495
      %v2981 = vsel %vm2975, %v2948, %v2497
      %v2983 = vsel %vm2975, %v2950, %v2499
      %v2985 = vsel %vm2975, %v2952, %v2501
      %v2987 = vsel %vm2975, %v2954, %v2503
      %v2989 = vsel %vm2975, %v2956, %v2505
      %v2991 = vsel %vm2975, %v2958, %v2507
      %v2993 = vsel %vm2975, %v2960, %v2509
      %v2995 = vsel %vm2975, %v2962, %v2511
      %v2997 = vsel %vm2975, %v2964, %v2513
      %v2999 = vsel %vm2975, %v2966, %v2515
      %v3001 = vsel %vm2975, %v2968, %v2517
      %v3003 = vsel %vm2975, %v2970, %v2519
      %v3005 = vsel %vm2975, %v2972, %v2521
      %v3007 = vsel %vm2975, %v2974, %v2523
      %vm3008 = vcmask 162816
      %v3010 = vsel %vm3008, %v2977, %v2573
      %v3012 = vsel %vm3008, %v2979, %v2575
      %v3014 = vsel %vm3008, %v2981, %v2577
      %v3016 = vsel %vm3008, %v2983, %v2579
      %v3018 = vsel %vm3008, %v2985, %v2581
      %v3020 = vsel %vm3008, %v2987, %v2583
      %v3022 = vsel %vm3008, %v2989, %v2585
      %v3024 = vsel %vm3008, %v2991, %v2587
      %v3026 = vsel %vm3008, %v2993, %v2589
      %v3028 = vsel %vm3008, %v2995, %v2591
      %v3030 = vsel %vm3008, %v2997, %v2593
      %v3032 = vsel %vm3008, %v2999, %v2595
      %v3034 = vsel %vm3008, %v3001, %v2597
      %v3036 = vsel %vm3008, %v3003, %v2599
      %v3038 = vsel %vm3008, %v3005, %v2601
      %v3040 = vsel %vm3008, %v3007, %v2603
      %vm3041 = vcmask 195584
      %v3043 = vsel %vm3041, %v3010, %v2669
      %v3045 = vsel %vm3041, %v3012, %v2671
      %v3047 = vsel %vm3041, %v3014, %v2673
      %v3049 = vsel %vm3041, %v3016, %v2675
      %v3051 = vsel %vm3041, %v3018, %v2677
      %v3053 = vsel %vm3041, %v3020, %v2679
      %v3055 = vsel %vm3041, %v3022, %v2681
      %v3057 = vsel %vm3041, %v3024, %v2683
      %v3059 = vsel %vm3041, %v3026, %v2685
      %v3061 = vsel %vm3041, %v3028, %v2687
      %v3063 = vsel %vm3041, %v3030, %v2689
      %v3065 = vsel %vm3041, %v3032, %v2691
      %v3067 = vsel %vm3041, %v3034, %v2693
      %v3069 = vsel %vm3041, %v3036, %v2695
      %v3071 = vsel %vm3041, %v3038, %v2697
      %v3073 = vsel %vm3041, %v3040, %v2699
      %vm3074 = vcmask 228352
      %v3076 = vsel %vm3074, %v3043, %v2749
      %v3078 = vsel %vm3074, %v3045, %v2751
      %v3080 = vsel %vm3074, %v3047, %v2753
      %v3082 = vsel %vm3074, %v3049, %v2755
      %v3084 = vsel %vm3074, %v3051, %v2757
      %v3086 = vsel %vm3074, %v3053, %v2759
      %v3088 = vsel %vm3074, %v3055, %v2761
      %v3090 = vsel %vm3074, %v3057, %v2763
      %v3092 = vsel %vm3074, %v3059, %v2765
      %v3094 = vsel %vm3074, %v3061, %v2767
      %v3096 = vsel %vm3074, %v3063, %v2769
      %v3098 = vsel %vm3074, %v3065, %v2771
      %v3100 = vsel %vm3074, %v3067, %v2773
      %v3102 = vsel %vm3074, %v3069, %v2775
      %v3104 = vsel %vm3074, %v3071, %v2777
      %v3106 = vsel %vm3074, %v3073, %v2779
      %vm3107 = vcmask 261120
      %v3109 = vsel %vm3107, %v3076, %v2829
      %v3111 = vsel %vm3107, %v3078, %v2831
      %v3113 = vsel %vm3107, %v3080, %v2833
      %v3115 = vsel %vm3107, %v3082, %v2835
      %v3117 = vsel %vm3107, %v3084, %v2837
      %v3119 = vsel %vm3107, %v3086, %v2839
      %v3121 = vsel %vm3107, %v3088, %v2841
      %v3123 = vsel %vm3107, %v3090, %v2843
      %v3125 = vsel %vm3107, %v3092, %v2845
      %v3127 = vsel %vm3107, %v3094, %v2847
      %v3129 = vsel %vm3107, %v3096, %v2849
      %v3131 = vsel %vm3107, %v3098, %v2851
      %v3133 = vsel %vm3107, %v3100, %v2853
      %v3135 = vsel %vm3107, %v3102, %v2855
      %v3137 = vsel %vm3107, %v3104, %v2857
      %v3139 = vsel %vm3107, %v3106, %v2859
      %v3140 = vld [vmem:[%s261] sm:$0xf]
      %v3141 = vld [vmem:[%s261 + $0x4] sm:$0xf]
      %v3142 = vld [vmem:[%s261 + $0x8] sm:$0xf]
      %v3143 = vld [vmem:[%s261 + $0xc] sm:$0xf]
      %v3144 = vld [vmem:[%s261 + $0x10] sm:$0x3]
      %v3150 = vunpack.c.l.b16 %v3140
      %v3151 = vunpack.c.l.b16 %v3141
      %v3152 = vunpack.c.l.b16 %v3142
      %v3153 = vunpack.c.l.b16 %v3143
      %v3154 = vunpack.c.l.b16 %v3144
      %v3155 = vpack.c.b16 %v3151, %v3150
      %v3156 = vpack.c.b16 %v3153, %v3152
      %v3157 = vpack.c.b16 %v3154, %v3154
      %vm3160 = vcmask 293888
      %v3161 = vsel %vm3160, %v3109, 0
      %v3163 = vsel %vm3160, %v3111, 0
      %v3165 = vsel %vm3160, %v3113, 0
      %v3167 = vsel %vm3160, %v3115, 0
      %v3169 = vsel %vm3160, %v3117, 0
      %v3171 = vsel %vm3160, %v3119, 0
      %v3173 = vsel %vm3160, %v3121, 0
      %v3175 = vsel %vm3160, %v3123, 0
      %v3177 = vsel %vm3160, %v3125, 0
      %v3179 = vsel %vm3160, %v3127, 0
      %v3181 = vsel %vm3160, %v3129, 0
      %v3183 = vsel %vm3160, %v3131, 0
      %v3185 = vsel %vm3160, %v3133, 0
      %v3187 = vsel %vm3160, %v3135, 0
      %v3189 = vsel %vm3160, %v3137, 0
      %v3191 = vsel %vm3160, %v3139, 0
      %vm3193 = vcmask 1041408
      %v3195 = vsel %vm3193, %v3157, 0
      %3197 = vmatprep.subr.bf16.mxu0 0
      %3198 = vmatpush1.bf16.msra.mxu0 %v3155
      %3199 = vmatprep.subr.bf16.mxu0 0
      %3200 = vmatpush1.bf16.msra.mxu0 %v3156
      %3201 = vmatprep.subr.bf16.mxu0 0
      %3202 = vmatpush1.bf16.msra.mxu0 %v3195
      %3203 = vmatprep.subr.bf16.mxu0 0
      %3204 = vmatpush1.bf16.msra.mxu0 0
      %3205 = vmatprep.subr.bf16.mxu0 0
      %3206 = vmatpush1.bf16.msra.mxu0 0
      %3207 = vmatprep.subr.bf16.mxu0 0
      %3208 = vmatpush1.bf16.msra.mxu0 0
      %3209 = vmatprep.subr.bf16.mxu0 0
      %3210 = vmatpush1.bf16.msra.mxu0 0
      %3211 = vmatprep.subr.bf16.mxu0 0
      %3212 = vmatpush1.bf16.msra.mxu0 0
      %3213 = vmatprep.subr.bf16.mxu0 0
      %3214 = vmatpush1.bf16.msra.mxu0 0
      %3215 = vmatprep.subr.bf16.mxu0 0
      %3216 = vmatpush1.bf16.msra.mxu0 0
      %3217 = vmatprep.subr.bf16.mxu0 0
      %3218 = vmatpush1.bf16.msra.mxu0 0
      %3219 = vmatprep.subr.bf16.mxu0 0
      %3220 = vmatpush1.bf16.msra.mxu0 0
      %3221 = vmatprep.subr.bf16.mxu0 0
      %3222 = vmatpush1.bf16.msra.mxu0 0
      %3223 = vmatprep.subr.bf16.mxu0 0
      %3224 = vmatpush1.bf16.msra.mxu0 0
      %3225 = vmatprep.subr.bf16.mxu0 0
      %3226 = vmatpush1.bf16.msra.mxu0 0
      %3227 = vmatprep.subr.bf16.mxu0 0
      %3228 = vmatpush1.bf16.msra.mxu0 0
      %3229 = vmatprep.mubr.bf16.mxu0 0
      %3230 = vmatmul.mubr.bf16.gmra.mrb[0].mxu0 %v3161
      %v3231 = vpop.f32.mrb[0].mxu0
      %v3232 = vadd.f32 0.0, %v3231
      %v3233 = vpop.f32.mrb[0].mxu0
      %v3234 = vpop.f32.mrb[0].mxu0
      %v3235 = vadd.f32 0.0, %v3234
      %v3236 = vpop.f32.mrb[0].mxu0
      %3237 = vmatprep.mubr.bf16.mxu0 0
      %3238 = vmatmul.mubr.bf16.gmra.mrb[0].mxu0 %v3163
      %v3239 = vpop.f32.mrb[0].mxu0
      %v3240 = vadd.f32 0.0, %v3239
      %v3241 = vpop.f32.mrb[0].mxu0
      %v3242 = vpop.f32.mrb[0].mxu0
      %v3243 = vadd.f32 0.0, %v3242
      %v3244 = vpop.f32.mrb[0].mxu0
      %3245 = vmatprep.mubr.bf16.mxu0 0
      %3246 = vmatmul.mubr.bf16.gmra.mrb[0].mxu0 %v3165
      %v3247 = vpop.f32.mrb[0].mxu0
      %v3248 = vadd.f32 0.0, %v3247
      %v3249 = vpop.f32.mrb[0].mxu0
      %v3250 = vpop.f32.mrb[0].mxu0
      %v3251 = vadd.f32 0.0, %v3250
      %v3252 = vpop.f32.mrb[0].mxu0
      %3253 = vmatprep.mubr.bf16.mxu0 0
      %3254 = vmatmul.mubr.bf16.gmra.mrb[0].mxu0 %v3167
      %v3255 = vpop.f32.mrb[0].mxu0
      %v3256 = vadd.f32 0.0, %v3255
      %v3257 = vpop.f32.mrb[0].mxu0
      %v3258 = vpop.f32.mrb[0].mxu0
      %v3259 = vadd.f32 0.0, %v3258
      %v3260 = vpop.f32.mrb[0].mxu0
      %3261 = vmatprep.mubr.bf16.mxu0 0
      %3262 = vmatmul.mubr.bf16.gmra.mrb[0].mxu0 %v3169
      %v3263 = vpop.f32.mrb[0].mxu0
      %v3264 = vadd.f32 0.0, %v3263
      %v3265 = vpop.f32.mrb[0].mxu0
      %v3266 = vpop.f32.mrb[0].mxu0
      %v3267 = vadd.f32 0.0, %v3266
      %v3268 = vpop.f32.mrb[0].mxu0
      %3269 = vmatprep.mubr.bf16.mxu0 0
      %3270 = vmatmul.mubr.bf16.gmra.mrb[0].mxu0 %v3171
      %v3271 = vpop.f32.mrb[0].mxu0
      %v3272 = vadd.f32 0.0, %v3271
      %v3273 = vpop.f32.mrb[0].mxu0
      %v3274 = vpop.f32.mrb[0].mxu0
      %v3275 = vadd.f32 0.0, %v3274
      %v3276 = vpop.f32.mrb[0].mxu0
      %3277 = vmatprep.mubr.bf16.mxu0 0
      %3278 = vmatmul.mubr.bf16.gmra.mrb[0].mxu0 %v3173
      %v3279 = vpop.f32.mrb[0].mxu0
      %v3280 = vadd.f32 0.0, %v3279
      %v3281 = vpop.f32.mrb[0].mxu0
      %v3282 = vpop.f32.mrb[0].mxu0
      %v3283 = vadd.f32 0.0, %v3282
      %v3284 = vpop.f32.mrb[0].mxu0
      %3285 = vmatprep.mubr.bf16.mxu0 0
      %3286 = vmatmul.mubr.bf16.gmra.mrb[0].mxu0 %v3175
      %v3287 = vpop.f32.mrb[0].mxu0
      %v3288 = vadd.f32 0.0, %v3287
      %v3289 = vpop.f32.mrb[0].mxu0
      %v3290 = vpop.f32.mrb[0].mxu0
      %v3291 = vadd.f32 0.0, %v3290
      %v3292 = vpop.f32.mrb[0].mxu0
      %3293 = vmatprep.mubr.bf16.mxu0 0
      %3294 = vmatmul.mubr.bf16.gmra.mrb[0].mxu0 %v3177
      %v3295 = vpop.f32.mrb[0].mxu0
      %v3296 = vadd.f32 0.0, %v3295
      %v3297 = vpop.f32.mrb[0].mxu0
      %v3298 = vpop.f32.mrb[0].mxu0
      %v3299 = vadd.f32 0.0, %v3298
      %v3300 = vpop.f32.mrb[0].mxu0
      %3301 = vmatprep.mubr.bf16.mxu0 0
      %3302 = vmatmul.mubr.bf16.gmra.mrb[0].mxu0 %v3179
      %v3303 = vpop.f32.mrb[0].mxu0
      %v3304 = vadd.f32 0.0, %v3303
      %v3305 = vpop.f32.mrb[0].mxu0
      %v3306 = vpop.f32.mrb[0].mxu0
      %v3307 = vadd.f32 0.0, %v3306
      %v3308 = vpop.f32.mrb[0].mxu0
      %3309 = vmatprep.mubr.bf16.mxu0 0
      %3310 = vmatmul.mubr.bf16.gmra.mrb[0].mxu0 %v3181
      %v3311 = vpop.f32.mrb[0].mxu0
      %v3312 = vadd.f32 0.0, %v3311
      %v3313 = vpop.f32.mrb[0].mxu0
      %v3314 = vpop.f32.mrb[0].mxu0
      %v3315 = vadd.f32 0.0, %v3314
      %v3316 = vpop.f32.mrb[0].mxu0
      %3317 = vmatprep.mubr.bf16.mxu0 0
      %3318 = vmatmul.mubr.bf16.gmra.mrb[0].mxu0 %v3183
      %v3319 = vpop.f32.mrb[0].mxu0
      %v3320 = vadd.f32 0.0, %v3319
      %v3321 = vpop.f32.mrb[0].mxu0
      %v3322 = vpop.f32.mrb[0].mxu0
      %v3323 = vadd.f32 0.0, %v3322
      %v3324 = vpop.f32.mrb[0].mxu0
      %3325 = vmatprep.mubr.bf16.mxu0 0
      %3326 = vmatmul.mubr.bf16.gmra.mrb[0].mxu0 %v3185
      %v3327 = vpop.f32.mrb[0].mxu0
      %v3328 = vadd.f32 0.0, %v3327
      %v3329 = vpop.f32.mrb[0].mxu0
      %v3330 = vpop.f32.mrb[0].mxu0
      %v3331 = vadd.f32 0.0, %v3330
      %v3332 = vpop.f32.mrb[0].mxu0
      %3333 = vmatprep.mubr.bf16.mxu0 0
      %3334 = vmatmul.mubr.bf16.gmra.mrb[0].mxu0 %v3187
      %v3335 = vpop.f32.mrb[0].mxu0
      %v3336 = vadd.f32 0.0, %v3335
      %v3337 = vpop.f32.mrb[0].mxu0
      %v3338 = vpop.f32.mrb[0].mxu0
      %v3339 = vadd.f32 0.0, %v3338
      %v3340 = vpop.f32.mrb[0].mxu0
      %3341 = vmatprep.mubr.bf16.mxu0 0
      %3342 = vmatmul.mubr.bf16.gmra.mrb[0].mxu0 %v3189
      %v3343 = vpop.f32.mrb[0].mxu0
      %v3344 = vadd.f32 0.0, %v3343
      %v3345 = vpop.f32.mrb[0].mxu0
      %v3346 = vpop.f32.mrb[0].mxu0
      %v3347 = vadd.f32 0.0, %v3346
      %v3348 = vpop.f32.mrb[0].mxu0
      %3349 = vmatprep.mubr.bf16.mxu0 0
      %3350 = vmatmul.mubr.bf16.gmra.mrb[0].mxu0 %v3191
      %v3351 = vpop.f32.mrb[0].mxu0
      %v3352 = vadd.f32 0.0, %v3351
      %v3353 = vpop.f32.mrb[0].mxu0
      %v3354 = vpop.f32.mrb[0].mxu0
      %v3355 = vadd.f32 0.0, %v3354
      %v3356 = vpop.f32.mrb[0].mxu0
      %3357 = vdwg.mxu0
      %v3358 = vld [vmem:[%s264] sm:$0x1]
      %v3360 = vlaneseq
      %v3361 = vshrl.u32 %v3360, 7
      %v3362 = vsub.s32 0, %v3361
      %v3363 = vrot.slane %v3358, %v3362
      %v3365 = vmul.f32 %v3232, %v3363
      %v3366 = vmul.f32 %v3235, %v3363
      %v3367 = vmul.f32 %v3240, %v3363
      %v3368 = vmul.f32 %v3243, %v3363
      %v3369 = vmul.f32 %v3248, %v3363
      %v3370 = vmul.f32 %v3251, %v3363
      %v3371 = vmul.f32 %v3256, %v3363
      %v3372 = vmul.f32 %v3259, %v3363
      %v3373 = vmul.f32 %v3264, %v3363
      %v3374 = vmul.f32 %v3267, %v3363
      %v3375 = vmul.f32 %v3272, %v3363
      %v3376 = vmul.f32 %v3275, %v3363
      %v3377 = vmul.f32 %v3280, %v3363
      %v3378 = vmul.f32 %v3283, %v3363
      %v3379 = vmul.f32 %v3288, %v3363
      %v3380 = vmul.f32 %v3291, %v3363
      %v3381 = vmul.f32 %v3296, %v3363
      %v3382 = vmul.f32 %v3299, %v3363
      %v3383 = vmul.f32 %v3304, %v3363
      %v3384 = vmul.f32 %v3307, %v3363
      %v3385 = vmul.f32 %v3312, %v3363
      %v3386 = vmul.f32 %v3315, %v3363
      %v3387 = vmul.f32 %v3320, %v3363
      %v3388 = vmul.f32 %v3323, %v3363
      %v3389 = vmul.f32 %v3328, %v3363
      %v3390 = vmul.f32 %v3331, %v3363
      %v3391 = vmul.f32 %v3336, %v3363
      %v3392 = vmul.f32 %v3339, %v3363
      %v3393 = vmul.f32 %v3344, %v3363
      %v3394 = vmul.f32 %v3347, %v3363
      %v3395 = vmul.f32 %v3352, %v3363
      %v3396 = vmul.f32 %v3355, %v3363
      %v3397 = vld [vmem:[%s267] sm:$0x1]
      %v3399 = vlaneseq
      %v3400 = vshrl.u32 %v3399, 7
      %v3401 = vsub.s32 0, %v3400
      %v3402 = vrot.slane %v3397, %v3401
      %v3404 = vadd.f32 %v3365, %v3402
      %v3405 = vadd.f32 %v3366, %v3402
      %v3406 = vadd.f32 %v3367, %v3402
      %v3407 = vadd.f32 %v3368, %v3402
      %v3408 = vadd.f32 %v3369, %v3402
      %v3409 = vadd.f32 %v3370, %v3402
      %v3410 = vadd.f32 %v3371, %v3402
      %v3411 = vadd.f32 %v3372, %v3402
      %v3412 = vadd.f32 %v3373, %v3402
      %v3413 = vadd.f32 %v3374, %v3402
      %v3414 = vadd.f32 %v3375, %v3402
      %v3415 = vadd.f32 %v3376, %v3402
      %v3416 = vadd.f32 %v3377, %v3402
      %v3417 = vadd.f32 %v3378, %v3402
      %v3418 = vadd.f32 %v3379, %v3402
      %v3419 = vadd.f32 %v3380, %v3402
      %v3420 = vadd.f32 %v3381, %v3402
      %v3421 = vadd.f32 %v3382, %v3402
      %v3422 = vadd.f32 %v3383, %v3402
      %v3423 = vadd.f32 %v3384, %v3402
      %v3424 = vadd.f32 %v3385, %v3402
      %v3425 = vadd.f32 %v3386, %v3402
      %v3426 = vadd.f32 %v3387, %v3402
      %v3427 = vadd.f32 %v3388, %v3402
      %v3428 = vadd.f32 %v3389, %v3402
      %v3429 = vadd.f32 %v3390, %v3402
      %v3430 = vadd.f32 %v3391, %v3402
      %v3431 = vadd.f32 %v3392, %v3402
      %v3432 = vadd.f32 %v3393, %v3402
      %v3433 = vadd.f32 %v3394, %v3402
      %v3434 = vadd.f32 %v3395, %v3402
      %v3435 = vadd.f32 %v3396, %v3402
      %v3436 = vmax.f32 %v3404, 0.0
      %v3437 = vmax.f32 %v3405, 0.0
      %v3438 = vmax.f32 %v3406, 0.0
      %v3439 = vmax.f32 %v3407, 0.0
      %v3440 = vmax.f32 %v3408, 0.0
      %v3441 = vmax.f32 %v3409, 0.0
      %v3442 = vmax.f32 %v3410, 0.0
      %v3443 = vmax.f32 %v3411, 0.0
      %v3444 = vmax.f32 %v3412, 0.0
      %v3445 = vmax.f32 %v3413, 0.0
      %v3446 = vmax.f32 %v3414, 0.0
      %v3447 = vmax.f32 %v3415, 0.0
      %v3448 = vmax.f32 %v3416, 0.0
      %v3449 = vmax.f32 %v3417, 0.0
      %v3450 = vmax.f32 %v3418, 0.0
      %v3451 = vmax.f32 %v3419, 0.0
      %v3452 = vmax.f32 %v3420, 0.0
      %v3453 = vmax.f32 %v3421, 0.0
      %v3454 = vmax.f32 %v3422, 0.0
      %v3455 = vmax.f32 %v3423, 0.0
      %v3456 = vmax.f32 %v3424, 0.0
      %v3457 = vmax.f32 %v3425, 0.0
      %v3458 = vmax.f32 %v3426, 0.0
      %v3459 = vmax.f32 %v3427, 0.0
      %v3460 = vmax.f32 %v3428, 0.0
      %v3461 = vmax.f32 %v3429, 0.0
      %v3462 = vmax.f32 %v3430, 0.0
      %v3463 = vmax.f32 %v3431, 0.0
      %v3464 = vmax.f32 %v3432, 0.0
      %v3465 = vmax.f32 %v3433, 0.0
      %v3466 = vmax.f32 %v3434, 0.0
      %v3467 = vmax.f32 %v3435, 0.0
      %v3468 = vmin.f32 %v3436, 6.0
      %v3469 = vmin.f32 %v3437, 6.0
      %v3470 = vmin.f32 %v3438, 6.0
      %v3471 = vmin.f32 %v3439, 6.0
      %v3472 = vmin.f32 %v3440, 6.0
      %v3473 = vmin.f32 %v3441, 6.0
      %v3474 = vmin.f32 %v3442, 6.0
      %v3475 = vmin.f32 %v3443, 6.0
      %v3476 = vmin.f32 %v3444, 6.0
      %v3477 = vmin.f32 %v3445, 6.0
      %v3478 = vmin.f32 %v3446, 6.0
      %v3479 = vmin.f32 %v3447, 6.0
      %v3480 = vmin.f32 %v3448, 6.0
      %v3481 = vmin.f32 %v3449, 6.0
      %v3482 = vmin.f32 %v3450, 6.0
      %v3483 = vmin.f32 %v3451, 6.0
      %v3484 = vmin.f32 %v3452, 6.0
      %v3485 = vmin.f32 %v3453, 6.0
      %v3486 = vmin.f32 %v3454, 6.0
      %v3487 = vmin.f32 %v3455, 6.0
      %v3488 = vmin.f32 %v3456, 6.0
      %v3489 = vmin.f32 %v3457, 6.0
      %v3490 = vmin.f32 %v3458, 6.0
      %v3491 = vmin.f32 %v3459, 6.0
      %v3492 = vmin.f32 %v3460, 6.0
      %v3493 = vmin.f32 %v3461, 6.0
      %v3494 = vmin.f32 %v3462, 6.0
      %v3495 = vmin.f32 %v3463, 6.0
      %v3496 = vmin.f32 %v3464, 6.0
      %v3497 = vmin.f32 %v3465, 6.0
      %v3498 = vmin.f32 %v3466, 6.0
      %v3499 = vmin.f32 %v3467, 6.0
      %v3500 = vpack.c.bf16 %v3469, %v3468
      %v3501 = vpack.c.bf16 %v3471, %v3470
      %v3502 = vpack.c.bf16 %v3473, %v3472
      %v3503 = vpack.c.bf16 %v3475, %v3474
      %v3504 = vpack.c.bf16 %v3477, %v3476
      %v3505 = vpack.c.bf16 %v3479, %v3478
      %v3506 = vpack.c.bf16 %v3481, %v3480
      %v3507 = vpack.c.bf16 %v3483, %v3482
      %v3508 = vpack.c.bf16 %v3485, %v3484
      %v3509 = vpack.c.bf16 %v3487, %v3486
      %v3510 = vpack.c.bf16 %v3489, %v3488
      %v3511 = vpack.c.bf16 %v3491, %v3490
      %v3512 = vpack.c.bf16 %v3493, %v3492
      %v3513 = vpack.c.bf16 %v3495, %v3494
      %v3514 = vpack.c.bf16 %v3497, %v3496
      %v3515 = vpack.c.bf16 %v3499, %v3498
      %v3532 = vunpack.c.l.b16 %v3500
      %v3533 = vunpack.c.h.b16 %v3500
      %v3534 = vunpack.c.l.b16 %v3501
      %v3535 = vunpack.c.h.b16 %v3501
      %v3536 = vunpack.c.l.b16 %v3502
      %v3537 = vunpack.c.h.b16 %v3502
      %v3538 = vunpack.c.l.b16 %v3503
      %v3539 = vunpack.c.h.b16 %v3503
      %v3540 = vunpack.c.l.b16 %v3504
      %v3541 = vunpack.c.h.b16 %v3504
      %v3542 = vunpack.c.l.b16 %v3505
      %v3543 = vunpack.c.h.b16 %v3505
      %v3544 = vunpack.c.l.b16 %v3506
      %v3545 = vunpack.c.h.b16 %v3506
      %v3546 = vunpack.c.l.b16 %v3507
      %v3547 = vunpack.c.h.b16 %v3507
      %v3548 = vunpack.c.l.b16 %v3508
      %v3549 = vunpack.c.h.b16 %v3508
      %v3550 = vunpack.c.l.b16 %v3509
      %v3551 = vunpack.c.h.b16 %v3509
      %v3552 = vunpack.c.l.b16 %v3510
      %v3553 = vunpack.c.h.b16 %v3510
      %v3554 = vunpack.c.l.b16 %v3511
      %v3555 = vunpack.c.h.b16 %v3511
      %v3556 = vunpack.c.l.b16 %v3512
      %v3557 = vunpack.c.h.b16 %v3512
      %v3558 = vunpack.c.l.b16 %v3513
      %v3559 = vunpack.c.h.b16 %v3513
      %v3560 = vunpack.c.l.b16 %v3514
      %v3561 = vunpack.c.h.b16 %v3514
      %v3562 = vunpack.c.l.b16 %v3515
      %v3563 = vunpack.c.h.b16 %v3515
      %v3564 = vpack.c.b16 %v3532, %v3532
      %v3565 = vpack.c.b16 %v3533, %v3533
      %v3566 = vpack.c.b16 %v3534, %v3534
      %v3567 = vpack.c.b16 %v3535, %v3535
      %v3568 = vpack.c.b16 %v3536, %v3536
      %v3569 = vpack.c.b16 %v3537, %v3537
      %v3570 = vpack.c.b16 %v3538, %v3538
      %v3571 = vpack.c.b16 %v3539, %v3539
      %v3572 = vpack.c.b16 %v3540, %v3540
      %v3573 = vpack.c.b16 %v3541, %v3541
      %v3574 = vpack.c.b16 %v3542, %v3542
      %v3575 = vpack.c.b16 %v3543, %v3543
      %v3576 = vpack.c.b16 %v3544, %v3544
      %v3577 = vpack.c.b16 %v3545, %v3545
      %v3578 = vpack.c.b16 %v3546, %v3546
      %v3579 = vpack.c.b16 %v3547, %v3547
      %v3580 = vpack.c.b16 %v3548, %v3548
      %v3581 = vpack.c.b16 %v3549, %v3549
      %v3582 = vpack.c.b16 %v3550, %v3550
      %v3583 = vpack.c.b16 %v3551, %v3551
      %v3584 = vpack.c.b16 %v3552, %v3552
      %v3585 = vpack.c.b16 %v3553, %v3553
      %v3586 = vpack.c.b16 %v3554, %v3554
      %v3587 = vpack.c.b16 %v3555, %v3555
      %v3588 = vpack.c.b16 %v3556, %v3556
      %v3589 = vpack.c.b16 %v3557, %v3557
      %v3590 = vpack.c.b16 %v3558, %v3558
      %v3591 = vpack.c.b16 %v3559, %v3559
      %v3592 = vpack.c.b16 %v3560, %v3560
      %v3593 = vpack.c.b16 %v3561, %v3561
      %v3594 = vpack.c.b16 %v3562, %v3562
      %v3595 = vpack.c.b16 %v3563, %v3563
      %3628 = vst [vmem:[%s279] sm:$0xf] %v3564
      %3629 = vst [vmem:[%s279 + $0x4] sm:$0xf] %v3565
      %3630 = vst [vmem:[%s279 + $0x8] sm:$0xf] %v3566
      %3631 = vst [vmem:[%s279 + $0xc] sm:$0xf] %v3567
      %3632 = vst [vmem:[%s279 + $0x10] sm:$0xf] %v3568
      %3633 = vst [vmem:[%s279 + $0x14] sm:$0xf] %v3569
      %3634 = vst [vmem:[%s279 + $0x18] sm:$0xf] %v3570
      %3635 = vst [vmem:[%s279 + $0x1c] sm:$0xf] %v3571
      %3636 = vst [vmem:[%s279 + $0x20] sm:$0xf] %v3572
      %3637 = vst [vmem:[%s279 + $0x24] sm:$0xf] %v3573
      %3638 = vst [vmem:[%s279 + $0x28] sm:$0xf] %v3574
      %3639 = vst [vmem:[%s279 + $0x2c] sm:$0xf] %v3575
      %3640 = vst [vmem:[%s279 + $0x30] sm:$0xf] %v3576
      %3641 = vst [vmem:[%s279 + $0x34] sm:$0xf] %v3577
      %3642 = vst [vmem:[%s279 + $0x38] sm:$0xf] %v3578
      %3643 = vst [vmem:[%s279 + $0x3c] sm:$0xf] %v3579
      %3644 = vst [vmem:[%s279 + $0x40] sm:$0xf] %v3580
      %3645 = vst [vmem:[%s279 + $0x44] sm:$0xf] %v3581
      %3646 = vst [vmem:[%s279 + $0x48] sm:$0xf] %v3582
      %3647 = vst [vmem:[%s279 + $0x4c] sm:$0xf] %v3583
      %3648 = vst [vmem:[%s279 + $0x50] sm:$0xf] %v3584
      %3649 = vst [vmem:[%s279 + $0x54] sm:$0xf] %v3585
      %3650 = vst [vmem:[%s279 + $0x58] sm:$0xf] %v3586
      %3651 = vst [vmem:[%s279 + $0x5c] sm:$0xf] %v3587
      %3652 = vst [vmem:[%s279 + $0x60] sm:$0xf] %v3588
      %3653 = vst [vmem:[%s279 + $0x64] sm:$0xf] %v3589
      %3654 = vst [vmem:[%s279 + $0x68] sm:$0xf] %v3590
      %3655 = vst [vmem:[%s279 + $0x6c] sm:$0xf] %v3591
      %3656 = vst [vmem:[%s279 + $0x70] sm:$0xf] %v3592
      %3657 = vst [vmem:[%s279 + $0x74] sm:$0xf] %v3593
      %3658 = vst [vmem:[%s279 + $0x78] sm:$0xf] %v3594
      %3659 = vst [vmem:[%s279 + $0x7c] sm:$0xf] %v3595
      %s3660 = smul.u32 32, %s22
      %p3661 = scmp.lt.s32.totalorder %s20, 1
      %s3662 = scalar_select %p3661, %s20, 1
      %p3663 = scmp.lt.s32.totalorder %s3660, 31
      %s3664 = scalar_select %p3663, %s3660, 31
      %p3665 = scmp.lt.s32.totalorder %s21, 0
      %s3666 = scalar_select %p3665, %s21, 0
      %s3667 = sadd.s32 %s3666, %s3664
      %s3668 = smul.addr %s3662, 32
      %s3669 = sadd.s32 %s3667, %s3668
      %s3670 = smul.addr %s3669, 4
      %s3671 = scalar_lea.vmem %s4, %s3670
      // Predicated region
      $region37: #{conv_block_forward.1} parent=35 // pred_check
        %p3672 = pneg %p160
      $region38: #{conv_block_forward.1} parent=35 // pred_check_branch
        %3674 = sbr.rel (%p3672) target = $region40
      $region39: #{conv_block_forward.1} parent=35 // pred_region
        %s3675 = smul.u32 32, %s22
      $region40: #{conv_block_forward.1} parent=35 // pred_fallthru
        _
    $region36: #{conv_block_forward.1} parent=5 // pred_fallthru
      _
    %p3676 = scmp.le.s32.totalorder 2, %s10
    // Predicated region
    $region41: #{conv_block_forward.1} parent=5 // pred_check
      %p3677 = pneg %p3676
    $region42: #{conv_block_forward.1} parent=5 // pred_check_branch
      %3679 = sbr.rel (%p3677) target = $region44
    $region43: #{conv_block_forward.1} parent=5 // pred_region
      %s3680 = ssub.s32 %s10, 2
      // Predicated region
      $region45: #{conv_block_forward.1} parent=43 // pred_check
        %p3681 = pneg %p166
      $region46: #{conv_block_forward.1} parent=43 // pred_check_branch
        %3683 = sbr.rel (%p3681) target = $region48
      $region47: #{conv_block_forward.1} parent=43 // pred_region
        %s3684 = smul.u32 32, %s25
        %p3685 = scmp.lt.s32.totalorder %s23, 1
        %s3686 = scalar_select %p3685, %s23, 1
        %p3687 = scmp.lt.s32.totalorder %s3684, 31
        %s3688 = scalar_select %p3687, %s3684, 31
        %p3689 = scmp.lt.s32.totalorder %s24, 0
        %s3690 = scalar_select %p3689, %s24, 0
        %s3691 = sadd.s32 %s3690, %s3688
        %s3692 = smul.addr %s3686, 32
        %s3693 = sadd.s32 %s3691, %s3692
        %s3694 = smul.addr %s3693, 4
        %s3695 = scalar_lea.vmem %s4, %s3694
      $region48: #{conv_block_forward.1} parent=43 // pred_fallthru
        _
    $region44: #{conv_block_forward.1} parent=5 // pred_fallthru
      _
  $region6: #{conv_block_forward.1} parent=0 // loop_footer
    %s14 = sadd.s32 1, %s10
  $region7: #{conv_block_forward.1} parent=0 // loop_footer_branch
    %9 = sbr.rel target = $region3
  $region8: #{conv_block_forward.1} parent=0 // loop_exit
    _

</llo_original>
